<compile_context>
chip_gen: v7x
topology: tpu7x:2x2x1
jax: 0.10.0
libtpu: 0.0.40
codegen_flags: <defaults>
</compile_context>

<pallas_src>
import math
import functools

import jax
import jax.numpy as jnp
import numpy as np
from jax.experimental import pallas as pl
from jax.experimental.pallas import tpu as pltpu


def _round_up(x, m):
    return (x + m - 1) // m * m


# ----------------------------------------------------------------------------
# Pallas kernel
# ----------------------------------------------------------------------------
def sab_kernel(x_ref, wqkv_ref, bqkv_ref, wo_ref, bo_ref, o_ref, *,
               num_heads, seq_len, pd):
    rows = x_ref.shape[0]                    # rows = tile_b * seq_len of (B*N)
    TB = rows // seq_len
    H, Pd = num_heads, pd
    HPd = H * Pd

    # ---- fused, lane-aligned Q/K/V projection: one bf16 MXU matmul, f32 acc ----
    qkv = jnp.dot(x_ref[...], wqkv_ref[...],
                  preferred_element_type=jnp.float32) + bqkv_ref[...]

    # ---- per-head attention over 128-aligned, 128-wide padded slices ----
    # TODO(synk): optional `mask` argument of MAB.forward not implemented
    # (this kernel covers the mask=None case).
    outs = []
    for h in range(H):
        qo = h * Pd
        ko = HPd + h * Pd
        vo = 2 * HPd + h * Pd
        q_h = qkv[:, qo:qo + Pd].reshape(TB, seq_len, Pd)   # unscaled (residual!)
        k_h = qkv[:, ko:ko + Pd].reshape(TB, seq_len, Pd)   # pre-scaled by 1/sqrt(Dv)
        v_h = qkv[:, vo:vo + Pd].reshape(TB, seq_len, Pd)

        logits = jnp.einsum('bqd,bkd->bqk',
                            q_h.astype(jnp.bfloat16), k_h.astype(jnp.bfloat16),
                            preferred_element_type=jnp.float32)     # (TB, N, N)
        m_max = jnp.max(logits, axis=-1, keepdims=True)
        e = jnp.exp(logits - m_max)
        denom = jnp.sum(e, axis=-1, keepdims=True)
        probs = e * pl.reciprocal(denom)                             # exact, EUP

        ctx = jnp.einsum('bqk,bkd->bqd',
                         probs.astype(jnp.bfloat16), v_h.astype(jnp.bfloat16),
                         preferred_element_type=jnp.float32)         # (TB, N, Pd)
        outs.append(q_h + ctx)               # per-head residual; padded lanes stay 0

    # concat along 128-aligned lane chunks (no cross-lane relayout)
    o = jnp.concatenate(outs, axis=-1).reshape(rows, HPd)

    # ---- output projection + ReLU residual (head-padded layout throughout) ----
    fc = jnp.dot(o.astype(jnp.bfloat16), wo_ref[...],
                 preferred_element_type=jnp.float32) + bo_ref[...]
    o_ref[...] = o + jnp.maximum(fc, 0.0)                            # O + relu(fc_O(O))


# ----------------------------------------------------------------------------
# Parameter packing (per-head 128-lane padding, scale folded into K)
# ----------------------------------------------------------------------------
def _pad_heads(w, b, num_heads, ds, pd):
    """Pad each head's ds-wide feature chunk to pd lanes (zero fill)."""
    fan_in = w.shape[0]
    w = jnp.pad(w.reshape(fan_in, num_heads, ds), ((0, 0), (0, 0), (0, pd - ds)))
    b = jnp.pad(b.reshape(1, num_heads, ds), ((0, 0), (0, 0), (0, pd - ds)))
    return w.reshape(fan_in, num_heads * pd), b.reshape(1, num_heads * pd)


def pack_params(params, num_heads):
    dv = params["wq"].shape[1]
    H = num_heads
    ds = dv // H
    pd = _round_up(ds, 128)
    scale = 1.0 / math.sqrt(dv)              # PyTorch MAB: / sqrt(dim_V)

    wq, bq = _pad_heads(params["wq"], params["bq"], H, ds, pd)
    wk, bk = _pad_heads(params["wk"] * scale, params["bk"] * scale, H, ds, pd)
    wv, bv = _pad_heads(params["wv"], params["bv"], H, ds, pd)
    w_qkv = jnp.concatenate([wq, wk, wv], axis=1)        # (Din, 3*H*pd), segments aligned
    b_qkv = jnp.concatenate([bq, bk, bv], axis=1)

    # fc_O: pad rows (input features) and columns (output features) to head-padded layout
    wo = params["wo"].reshape(H, ds, dv)
    wo = jnp.pad(wo, ((0, 0), (0, pd - ds), (0, 0))).reshape(H * pd, dv)
    wo, bo = _pad_heads(wo, params["bo"], H, ds, pd)      # (H*pd, H*pd), (1, H*pd)

    return dict(w_qkv=w_qkv.astype(jnp.bfloat16),
                b_qkv=b_qkv.astype(jnp.float32),
                w_o=wo.astype(jnp.bfloat16),
                b_o=bo.astype(jnp.float32),
                Pd=pd)


# ----------------------------------------------------------------------------
# Generation-aware VMEM limit and tile chooser
# ----------------------------------------------------------------------------
def _vmem_limit_bytes():
    # ~75% of physical VMEM, capped: v7x (64 MiB phys) -> 48 MiB, v5e/v6e -> 96 MiB.
    try:
        cap = int(pltpu.get_tpu_info().vmem_capacity_bytes)
    except Exception:
        cap = 64 * 1024 * 1024
    return max(32 * 1024 * 1024, min(int(cap * 0.75), 96 * 1024 * 1024))


def _choose_tile_b(batch, seq_len, d_in, num_heads, pd, vmem_limit):
    H = num_heads
    w_qkv_cols = 3 * H * pd
    w_out_cols = H * pd
    # double-buffered resident weights + biases
    weight_bytes = 2 * (d_in * w_qkv_cols * 2 + w_out_cols * w_out_cols * 2
                        + w_qkv_cols * 4 + w_out_cols * 4)
    budget = max(int(vmem_limit * 0.6) - weight_bytes, 1)

    def step_bytes(tb):
        rows = tb * seq_len
        x_t = 2 * rows * d_in * 2                       # bf16 input, double-buffered
        out_t = 2 * rows * w_out_cols * 4               # f32 output, double-buffered
        qkv = rows * w_qkv_cols * (4 + 2)               # f32 projection + bf16 casts
        ctx = rows * w_out_cols * 4                     # all heads' (q_h + ctx) live
        att = 2 * 3 * tb * seq_len * seq_len * 4        # ~2 heads of logits/exp/probs
        return x_t + out_t + qkv + ctx + att

    divisors = [d for d in range(1, batch + 1) if batch % d == 0]
    shape_ok = [tb for tb in divisors
                if (tb * seq_len) % 8 == 0 or tb * seq_len == batch * seq_len]
    if not shape_ok:
        shape_ok = [batch]                              # full-array block is always legal
    feasible = [tb for tb in shape_ok if step_bytes(tb) <= budget]
    if not feasible:
        feasible = [min(shape_ok)]                      # smallest footprint available
    multi = [tb for tb in feasible if batch // tb >= 2]  # keep >=2 grid steps (v7x 2 TCs)
    pool = multi if multi else feasible
    small = [tb for tb in pool if tb * seq_len <= 1024]  # amortize step overhead, cap tile
    return max(small) if small else min(pool)


# ----------------------------------------------------------------------------
# Wrapper
# ----------------------------------------------------------------------------
def sab_forward(x, params, num_heads, *, tile_b=None):
    B, N, Din = x.shape
    Dv = params["wq"].shape[1]
    assert Dv % num_heads == 0
    H = num_heads
    ds = Dv // H
    packed = pack_params(params, num_heads)
    Pd = packed["Pd"]
    HPd = H * Pd
    Wqkv = 3 * HPd

    vmem_limit = _vmem_limit_bytes()
    tb = _choose_tile_b(B, N, Din, H, Pd, vmem_limit) if tile_b is None else tile_b
    assert B % tb == 0
    rows = tb * N
    assert rows % 8 == 0 or rows == B * N
    grid = (B // tb,)

    kernel = functools.partial(sab_kernel, num_heads=H, seq_len=N, pd=Pd)

    out_pad = pl.pallas_call(
        kernel,
        out_shape=jax.ShapeDtypeStruct((B * N, HPd), jnp.float32),
        grid=grid,
        in_specs=[
            pl.BlockSpec((rows, Din), lambda i: (i, 0)),   # x row tile (bf16)
            pl.BlockSpec((Din, Wqkv), lambda i: (0, 0)),   # fused, head-padded W_qkv (bf16)
            pl.BlockSpec((1, Wqkv), lambda i: (0, 0)),     # fused b_qkv (f32)
            pl.BlockSpec((HPd, HPd), lambda i: (0, 0)),    # head-padded W_o (bf16)
            pl.BlockSpec((1, HPd), lambda i: (0, 0)),      # head-padded b_o (f32)
        ],
        out_specs=pl.BlockSpec((rows, HPd), lambda i: (i, 0)),
        compiler_params=pltpu.CompilerParams(
            dimension_semantics=("parallel",),
            vmem_limit_bytes=vmem_limit),
    )(x.reshape(B * N, Din).astype(jnp.bfloat16),
      packed["w_qkv"], packed["b_qkv"], packed["w_o"], packed["b_o"])

    # strip per-head lane padding (kernel stays 128-lane dense)
    return out_pad.reshape(B, N, H, Pd)[..., :ds].reshape(B, N, Dv)


# ----------------------------------------------------------------------------
# Pure-JAX references
# ----------------------------------------------------------------------------
def sab_reference_f32(x, params, num_heads):
    """Mirror of the PyTorch MAB.forward (mask=None) in full f32."""
    Dv = params["wq"].shape[1]
    ds = Dv // num_heads
    q = x @ params["wq"] + params["bq"]
    k = x @ params["wk"] + params["bk"]
    v = x @ params["wv"] + params["bv"]
    scale = 1.0 / math.sqrt(Dv)
    outs = []
    for h in range(num_heads):
        qh = q[:, :, h * ds:(h + 1) * ds]
        kh = k[:, :, h * ds:(h + 1) * ds]
        vh = v[:, :, h * ds:(h + 1) * ds]
        a = jax.nn.softmax(jnp.einsum('bqd,bkd->bqk', qh, kh) * scale, axis=-1)
        outs.append(qh + jnp.einsum('bqk,bkd->bqd', a, vh))
    o = jnp.concatenate(outs, axis=-1)
    return o + jax.nn.relu(o @ params["wo"] + params["bo"])


def sab_reference_mirrored(x, params, num_heads):
    """Plain-JAX mirror of the kernel's padded-layout bf16/f32 math."""
    packed = pack_params(params, num_heads)
    B, N, Din = x.shape
    Dv = params["wq"].shape[1]
    H = num_heads
    ds = Dv // H
    Pd = packed["Pd"]
    HPd = H * Pd
    x2 = x.reshape(B * N, Din).astype(jnp.bfloat16)
    qkv = jnp.dot(x2, packed["w_qkv"],
                  preferred_element_type=jnp.float32) + packed["b_qkv"]
    q = qkv[:, 0 * HPd:1 * HPd].reshape(B, N, H, Pd)
    k = qkv[:, 1 * HPd:2 * HPd].reshape(B, N, H, Pd)   # already scaled
    v = qkv[:, 2 * HPd:3 * HPd].reshape(B, N, H, Pd)
    logits = jnp.einsum('bqhd,bkhd->bhqk',
                        q.astype(jnp.bfloat16), k.astype(jnp.bfloat16),
                        preferred_element_type=jnp.float32)
    a = jax.nn.softmax(logits, axis=-1)
    ctx = jnp.einsum('bhqk,bkhd->bqhd',
                     a.astype(jnp.bfloat16), v.astype(jnp.bfloat16),
                     preferred_element_type=jnp.float32)
    o = (q + ctx).reshape(B * N, HPd)
    fc = jnp.dot(o.astype(jnp.bfloat16), packed["w_o"],
                 preferred_element_type=jnp.float32) + packed["b_o"]
    out_pad = o + jnp.maximum(fc, 0.0)
    return out_pad.reshape(B, N, H, Pd)[..., :ds].reshape(B, N, Dv)


# ----------------------------------------------------------------------------
# Deterministic synthetic parameters (nn.Linear-style uniform init)
# ----------------------------------------------------------------------------
def init_params(key, dim_in, dim_out):
    keys = jax.random.split(key, 8)

    def linear(kw, kb, fan_in, fan_out):
        bound = 1.0 / math.sqrt(fan_in)
        w = jax.random.uniform(kw, (fan_in, fan_out), jnp.float32, -bound, bound)
        b = jax.random.uniform(kb, (1, fan_out), jnp.float32, -bound, bound)
        return w, b

    wq, bq = linear(keys[0], keys[1], dim_in, dim_out)
    wk, bk = linear(keys[2], keys[3], dim_in, dim_out)
    wv, bv = linear(keys[4], keys[5], dim_in, dim_out)
    wo, bo = linear(keys[6], keys[7], dim_out, dim_out)
    return dict(wq=wq, bq=bq, wk=wk, bk=bk, wv=wv, bv=bv, wo=wo, bo=bo)


if __name__ == "__main__":
    B, N = 2, 8              # batch, set/sequence size
    dim_in, dim_out = 32, 32
    num_heads = 4            # dim_out must be divisible by num_heads

    key = jax.random.PRNGKey(0)
    k_x, k_p = jax.random.split(key)
    x = jax.random.normal(k_x, (B, N, dim_in), dtype=jnp.float32)
    params = init_params(k_p, dim_in, dim_out)

    ref_bf = sab_reference_mirrored(x, params, num_heads)   # same bf16 matmul inputs
    ref_f32 = sab_reference_f32(x, params, num_heads)       # PyTorch-exact f32 math

    # (a) heuristic tile (grid=(2,), parallel); (b) tile_b=1 (grid=(2,)); (c) single-step grid.
    for tile_b in (None, 1, 2):
        out = jax.block_until_ready(sab_forward(x, params, num_heads, tile_b=tile_b))
        np.testing.assert_allclose(np.asarray(out), np.asarray(ref_bf),
                                   rtol=5e-3, atol=5e-3)
        np.testing.assert_allclose(np.asarray(out), np.asarray(ref_f32),
                                   rtol=3e-2, atol=3e-2)

    print("KERNEL_OK")
</pallas_src>

<mosaic_0001>
module attributes {stable_mosaic.version = 11 : i64} {
  func.func @sab_kernel(%arg0: i32, %arg1: memref<8x32xbf16, #tpu.memory_space<vmem>>, %arg2: memref<32x1536xbf16, #tpu.memory_space<vmem>>, %arg3: memref<1x1536xf32, #tpu.memory_space<vmem>>, %arg4: memref<512x512xbf16, #tpu.memory_space<vmem>>, %arg5: memref<1x512xf32, #tpu.memory_space<vmem>>, %arg6: memref<8x512xf32, #tpu.memory_space<vmem>>) attributes {dimension_semantics = [#tpu.dimension_semantics<parallel>], iteration_bounds = array<i64: 2>, scalar_prefetch = 0 : i64, scratch_operands = 0 : i64, tpu.core_type = #tpu.core_type<tc>, window_params = [{transform_indices = @transform_0, window_bounds = array<i64: 8, 32>}, {pipeline_mode = #tpu.pipeline_mode<synchronous>, transform_indices = @transform_1, window_bounds = array<i64: 32, 1536>}, {pipeline_mode = #tpu.pipeline_mode<synchronous>, transform_indices = @transform_2, window_bounds = array<i64: 1, 1536>}, {pipeline_mode = #tpu.pipeline_mode<synchronous>, transform_indices = @transform_3, window_bounds = array<i64: 512, 512>}, {pipeline_mode = #tpu.pipeline_mode<synchronous>, transform_indices = @transform_4, window_bounds = array<i64: 1, 512>}, {transform_indices = @transform_5, window_bounds = array<i64: 8, 512>}]} {
    %c0 = arith.constant 0 : index
    %c0_0 = arith.constant 0 : index
    %0 = vector.load %arg1[%c0, %c0_0] : memref<8x32xbf16, #tpu.memory_space<vmem>>, vector<8x32xbf16>
    %c0_1 = arith.constant 0 : index
    %c0_2 = arith.constant 0 : index
    %1 = vector.load %arg2[%c0_1, %c0_2] : memref<32x1536xbf16, #tpu.memory_space<vmem>>, vector<32x1536xbf16>
    %cst = arith.constant dense<0.000000e+00> : vector<8x1536xf32>
    %2 = tpu.matmul %0, %1, %cst {dimension_numbers = #tpu.dot_dimension_numbers<[1], [0], [0], [1], [0, 0, 1, 1], [], []>} : vector<8x32xbf16>, vector<32x1536xbf16>, vector<8x1536xf32> -> vector<8x1536xf32>
    %c0_3 = arith.constant 0 : index
    %c0_4 = arith.constant 0 : index
    %3 = vector.load %arg3[%c0_3, %c0_4] : memref<1x1536xf32, #tpu.memory_space<vmem>>, vector<1x1536xf32>
    %4 = vector.broadcast %3 : vector<1x1536xf32> to vector<8x1536xf32>
    %5 = arith.addf %2, %4 : vector<8x1536xf32>
    %6 = vector.extract_strided_slice %5 {offsets = [0, 0], sizes = [8, 128], strides = [1, 1]} : vector<8x1536xf32> to vector<8x128xf32>
    %7 = vector.shape_cast %6 : vector<8x128xf32> to vector<1x8x128xf32>
    %8 = vector.extract_strided_slice %5 {offsets = [0, 512], sizes = [8, 128], strides = [1, 1]} : vector<8x1536xf32> to vector<8x128xf32>
    %9 = vector.shape_cast %8 : vector<8x128xf32> to vector<1x8x128xf32>
    %10 = vector.extract_strided_slice %5 {offsets = [0, 1024], sizes = [8, 128], strides = [1, 1]} : vector<8x1536xf32> to vector<8x128xf32>
    %11 = vector.shape_cast %10 : vector<8x128xf32> to vector<1x8x128xf32>
    %12 = arith.truncf %7 : vector<1x8x128xf32> to vector<1x8x128xbf16>
    %13 = arith.truncf %9 : vector<1x8x128xf32> to vector<1x8x128xbf16>
    "tpu.trace_start"() <{level = 10 : i32, message = "bqd,bkd->bqk"}> : () -> ()
    %cst_5 = arith.constant dense<0.000000e+00> : vector<1x8x8xf32>
    %14 = tpu.matmul %12, %13, %cst_5 {dimension_numbers = #tpu.dot_dimension_numbers<[2], [2], [1], [1], [0, 0, 0, 1, 1, 1], [0], [0]>} : vector<1x8x128xbf16>, vector<1x8x128xbf16>, vector<1x8x8xf32> -> vector<1x8x8xf32>
    "tpu.trace_stop"() : () -> ()
    %cst_6 = arith.constant dense<0xFF800000> : vector<1x8xf32>
    %15 = vector.multi_reduction <maximumf>, %14, %cst_6 [2] : vector<1x8x8xf32> to vector<1x8xf32>
    %16 = vector.shape_cast %15 : vector<1x8xf32> to vector<1x8x1xf32>
    %17 = vector.broadcast %16 : vector<1x8x1xf32> to vector<1x8x8xf32>
    %18 = arith.subf %14, %17 : vector<1x8x8xf32>
    %19 = math.exp %18 : vector<1x8x8xf32>
    %cst_7 = arith.constant dense<0.000000e+00> : vector<1x8xf32>
    %20 = vector.multi_reduction <add>, %19, %cst_7 [2] : vector<1x8x8xf32> to vector<1x8xf32>
    %21 = vector.shape_cast %20 : vector<1x8xf32> to vector<1x8x1xf32>
    %22 = tpu.reciprocal %21 : vector<1x8x1xf32> -> vector<1x8x1xf32>
    %23 = vector.broadcast %22 : vector<1x8x1xf32> to vector<1x8x8xf32>
    %24 = arith.mulf %19, %23 : vector<1x8x8xf32>
    %25 = arith.truncf %24 : vector<1x8x8xf32> to vector<1x8x8xbf16>
    %26 = arith.truncf %11 : vector<1x8x128xf32> to vector<1x8x128xbf16>
    "tpu.trace_start"() <{level = 10 : i32, message = "bqk,bkd->bqd"}> : () -> ()
    %cst_8 = arith.constant dense<0.000000e+00> : vector<1x8x128xf32>
    %27 = tpu.matmul %25, %26, %cst_8 {dimension_numbers = #tpu.dot_dimension_numbers<[2], [1], [1], [2], [0, 0, 0, 1, 1, 2], [0], [0]>} : vector<1x8x8xbf16>, vector<1x8x128xbf16>, vector<1x8x128xf32> -> vector<1x8x128xf32>
    "tpu.trace_stop"() : () -> ()
    %28 = arith.addf %7, %27 : vector<1x8x128xf32>
    %29 = vector.extract_strided_slice %5 {offsets = [0, 128], sizes = [8, 128], strides = [1, 1]} : vector<8x1536xf32> to vector<8x128xf32>
    %30 = vector.shape_cast %29 : vector<8x128xf32> to vector<1x8x128xf32>
    %31 = vector.extract_strided_slice %5 {offsets = [0, 640], sizes = [8, 128], strides = [1, 1]} : vector<8x1536xf32> to vector<8x128xf32>
    %32 = vector.shape_cast %31 : vector<8x128xf32> to vector<1x8x128xf32>
    %33 = vector.extract_strided_slice %5 {offsets = [0, 1152], sizes = [8, 128], strides = [1, 1]} : vector<8x1536xf32> to vector<8x128xf32>
    %34 = vector.shape_cast %33 : vector<8x128xf32> to vector<1x8x128xf32>
    %35 = arith.truncf %30 : vector<1x8x128xf32> to vector<1x8x128xbf16>
    %36 = arith.truncf %32 : vector<1x8x128xf32> to vector<1x8x128xbf16>
    "tpu.trace_start"() <{level = 10 : i32, message = "bqd,bkd->bqk"}> : () -> ()
    %cst_9 = arith.constant dense<0.000000e+00> : vector<1x8x8xf32>
    %37 = tpu.matmul %35, %36, %cst_9 {dimension_numbers = #tpu.dot_dimension_numbers<[2], [2], [1], [1], [0, 0, 0, 1, 1, 1], [0], [0]>} : vector<1x8x128xbf16>, vector<1x8x128xbf16>, vector<1x8x8xf32> -> vector<1x8x8xf32>
    "tpu.trace_stop"() : () -> ()
    %cst_10 = arith.constant dense<0xFF800000> : vector<1x8xf32>
    %38 = vector.multi_reduction <maximumf>, %37, %cst_10 [2] : vector<1x8x8xf32> to vector<1x8xf32>
    %39 = vector.shape_cast %38 : vector<1x8xf32> to vector<1x8x1xf32>
    %40 = vector.broadcast %39 : vector<1x8x1xf32> to vector<1x8x8xf32>
    %41 = arith.subf %37, %40 : vector<1x8x8xf32>
    %42 = math.exp %41 : vector<1x8x8xf32>
    %cst_11 = arith.constant dense<0.000000e+00> : vector<1x8xf32>
    %43 = vector.multi_reduction <add>, %42, %cst_11 [2] : vector<1x8x8xf32> to vector<1x8xf32>
    %44 = vector.shape_cast %43 : vector<1x8xf32> to vector<1x8x1xf32>
    %45 = tpu.reciprocal %44 : vector<1x8x1xf32> -> vector<1x8x1xf32>
    %46 = vector.broadcast %45 : vector<1x8x1xf32> to vector<1x8x8xf32>
    %47 = arith.mulf %42, %46 : vector<1x8x8xf32>
    %48 = arith.truncf %47 : vector<1x8x8xf32> to vector<1x8x8xbf16>
    %49 = arith.truncf %34 : vector<1x8x128xf32> to vector<1x8x128xbf16>
    "tpu.trace_start"() <{level = 10 : i32, message = "bqk,bkd->bqd"}> : () -> ()
    %cst_12 = arith.constant dense<0.000000e+00> : vector<1x8x128xf32>
    %50 = tpu.matmul %48, %49, %cst_12 {dimension_numbers = #tpu.dot_dimension_numbers<[2], [1], [1], [2], [0, 0, 0, 1, 1, 2], [0], [0]>} : vector<1x8x8xbf16>, vector<1x8x128xbf16>, vector<1x8x128xf32> -> vector<1x8x128xf32>
    "tpu.trace_stop"() : () -> ()
    %51 = arith.addf %30, %50 : vector<1x8x128xf32>
    %52 = vector.extract_strided_slice %5 {offsets = [0, 256], sizes = [8, 128], strides = [1, 1]} : vector<8x1536xf32> to vector<8x128xf32>
    %53 = vector.shape_cast %52 : vector<8x128xf32> to vector<1x8x128xf32>
    %54 = vector.extract_strided_slice %5 {offsets = [0, 768], sizes = [8, 128], strides = [1, 1]} : vector<8x1536xf32> to vector<8x128xf32>
    %55 = vector.shape_cast %54 : vector<8x128xf32> to vector<1x8x128xf32>
    %56 = vector.extract_strided_slice %5 {offsets = [0, 1280], sizes = [8, 128], strides = [1, 1]} : vector<8x1536xf32> to vector<8x128xf32>
    %57 = vector.shape_cast %56 : vector<8x128xf32> to vector<1x8x128xf32>
    %58 = arith.truncf %53 : vector<1x8x128xf32> to vector<1x8x128xbf16>
    %59 = arith.truncf %55 : vector<1x8x128xf32> to vector<1x8x128xbf16>
    "tpu.trace_start"() <{level = 10 : i32, message = "bqd,bkd->bqk"}> : () -> ()
    %cst_13 = arith.constant dense<0.000000e+00> : vector<1x8x8xf32>
    %60 = tpu.matmul %58, %59, %cst_13 {dimension_numbers = #tpu.dot_dimension_numbers<[2], [2], [1], [1], [0, 0, 0, 1, 1, 1], [0], [0]>} : vector<1x8x128xbf16>, vector<1x8x128xbf16>, vector<1x8x8xf32> -> vector<1x8x8xf32>
    "tpu.trace_stop"() : () -> ()
    %cst_14 = arith.constant dense<0xFF800000> : vector<1x8xf32>
    %61 = vector.multi_reduction <maximumf>, %60, %cst_14 [2] : vector<1x8x8xf32> to vector<1x8xf32>
    %62 = vector.shape_cast %61 : vector<1x8xf32> to vector<1x8x1xf32>
    %63 = vector.broadcast %62 : vector<1x8x1xf32> to vector<1x8x8xf32>
    %64 = arith.subf %60, %63 : vector<1x8x8xf32>
    %65 = math.exp %64 : vector<1x8x8xf32>
    %cst_15 = arith.constant dense<0.000000e+00> : vector<1x8xf32>
    %66 = vector.multi_reduction <add>, %65, %cst_15 [2] : vector<1x8x8xf32> to vector<1x8xf32>
    %67 = vector.shape_cast %66 : vector<1x8xf32> to vector<1x8x1xf32>
    %68 = tpu.reciprocal %67 : vector<1x8x1xf32> -> vector<1x8x1xf32>
    %69 = vector.broadcast %68 : vector<1x8x1xf32> to vector<1x8x8xf32>
    %70 = arith.mulf %65, %69 : vector<1x8x8xf32>
    %71 = arith.truncf %70 : vector<1x8x8xf32> to vector<1x8x8xbf16>
    %72 = arith.truncf %57 : vector<1x8x128xf32> to vector<1x8x128xbf16>
    "tpu.trace_start"() <{level = 10 : i32, message = "bqk,bkd->bqd"}> : () -> ()
    %cst_16 = arith.constant dense<0.000000e+00> : vector<1x8x128xf32>
    %73 = tpu.matmul %71, %72, %cst_16 {dimension_numbers = #tpu.dot_dimension_numbers<[2], [1], [1], [2], [0, 0, 0, 1, 1, 2], [0], [0]>} : vector<1x8x8xbf16>, vector<1x8x128xbf16>, vector<1x8x128xf32> -> vector<1x8x128xf32>
    "tpu.trace_stop"() : () -> ()
    %74 = arith.addf %53, %73 : vector<1x8x128xf32>
    %75 = vector.extract_strided_slice %5 {offsets = [0, 384], sizes = [8, 128], strides = [1, 1]} : vector<8x1536xf32> to vector<8x128xf32>
    %76 = vector.shape_cast %75 : vector<8x128xf32> to vector<1x8x128xf32>
    %77 = vector.extract_strided_slice %5 {offsets = [0, 896], sizes = [8, 128], strides = [1, 1]} : vector<8x1536xf32> to vector<8x128xf32>
    %78 = vector.shape_cast %77 : vector<8x128xf32> to vector<1x8x128xf32>
    %79 = vector.extract_strided_slice %5 {offsets = [0, 1408], sizes = [8, 128], strides = [1, 1]} : vector<8x1536xf32> to vector<8x128xf32>
    %80 = vector.shape_cast %79 : vector<8x128xf32> to vector<1x8x128xf32>
    %81 = arith.truncf %76 : vector<1x8x128xf32> to vector<1x8x128xbf16>
    %82 = arith.truncf %78 : vector<1x8x128xf32> to vector<1x8x128xbf16>
    "tpu.trace_start"() <{level = 10 : i32, message = "bqd,bkd->bqk"}> : () -> ()
    %cst_17 = arith.constant dense<0.000000e+00> : vector<1x8x8xf32>
    %83 = tpu.matmul %81, %82, %cst_17 {dimension_numbers = #tpu.dot_dimension_numbers<[2], [2], [1], [1], [0, 0, 0, 1, 1, 1], [0], [0]>} : vector<1x8x128xbf16>, vector<1x8x128xbf16>, vector<1x8x8xf32> -> vector<1x8x8xf32>
    "tpu.trace_stop"() : () -> ()
    %cst_18 = arith.constant dense<0xFF800000> : vector<1x8xf32>
    %84 = vector.multi_reduction <maximumf>, %83, %cst_18 [2] : vector<1x8x8xf32> to vector<1x8xf32>
    %85 = vector.shape_cast %84 : vector<1x8xf32> to vector<1x8x1xf32>
    %86 = vector.broadcast %85 : vector<1x8x1xf32> to vector<1x8x8xf32>
    %87 = arith.subf %83, %86 : vector<1x8x8xf32>
    %88 = math.exp %87 : vector<1x8x8xf32>
    %cst_19 = arith.constant dense<0.000000e+00> : vector<1x8xf32>
    %89 = vector.multi_reduction <add>, %88, %cst_19 [2] : vector<1x8x8xf32> to vector<1x8xf32>
    %90 = vector.shape_cast %89 : vector<1x8xf32> to vector<1x8x1xf32>
    %91 = tpu.reciprocal %90 : vector<1x8x1xf32> -> vector<1x8x1xf32>
    %92 = vector.broadcast %91 : vector<1x8x1xf32> to vector<1x8x8xf32>
    %93 = arith.mulf %88, %92 : vector<1x8x8xf32>
    %94 = arith.truncf %93 : vector<1x8x8xf32> to vector<1x8x8xbf16>
    %95 = arith.truncf %80 : vector<1x8x128xf32> to vector<1x8x128xbf16>
    "tpu.trace_start"() <{level = 10 : i32, message = "bqk,bkd->bqd"}> : () -> ()
    %cst_20 = arith.constant dense<0.000000e+00> : vector<1x8x128xf32>
    %96 = tpu.matmul %94, %95, %cst_20 {dimension_numbers = #tpu.dot_dimension_numbers<[2], [1], [1], [2], [0, 0, 0, 1, 1, 2], [0], [0]>} : vector<1x8x8xbf16>, vector<1x8x128xbf16>, vector<1x8x128xf32> -> vector<1x8x128xf32>
    "tpu.trace_stop"() : () -> ()
    %97 = arith.addf %76, %96 : vector<1x8x128xf32>
    %98 = tpu.concatenate %28, %51, %74, %97 in 2 : vector<1x8x128xf32>, vector<1x8x128xf32>, vector<1x8x128xf32>, vector<1x8x128xf32> -> vector<1x8x512xf32>
    %99 = vector.shape_cast %98 : vector<1x8x512xf32> to vector<8x512xf32>
    %100 = arith.truncf %99 : vector<8x512xf32> to vector<8x512xbf16>
    %c0_21 = arith.constant 0 : index
    %c0_22 = arith.constant 0 : index
    %101 = vector.load %arg4[%c0_21, %c0_22] : memref<512x512xbf16, #tpu.memory_space<vmem>>, vector<512x512xbf16>
    %cst_23 = arith.constant dense<0.000000e+00> : vector<8x512xf32>
    %102 = tpu.matmul %100, %101, %cst_23 {dimension_numbers = #tpu.dot_dimension_numbers<[1], [0], [0], [1], [0, 0, 1, 1], [], []>} : vector<8x512xbf16>, vector<512x512xbf16>, vector<8x512xf32> -> vector<8x512xf32>
    %c0_24 = arith.constant 0 : index
    %c0_25 = arith.constant 0 : index
    %103 = vector.load %arg5[%c0_24, %c0_25] : memref<1x512xf32, #tpu.memory_space<vmem>>, vector<1x512xf32>
    %104 = vector.broadcast %103 : vector<1x512xf32> to vector<8x512xf32>
    %105 = arith.addf %102, %104 : vector<8x512xf32>
    %cst_26 = arith.constant 0.000000e+00 : f32
    %106 = vector.broadcast %cst_26 : f32 to vector<8x512xf32>
    %107 = arith.maximumf %105, %106 : vector<8x512xf32>
    %108 = arith.addf %99, %107 : vector<8x512xf32>
    %c0_27 = arith.constant 0 : index
    %c0_28 = arith.constant 0 : index
    %109 = vector.load %arg6[%c0_27, %c0_28] : memref<8x512xf32, #tpu.memory_space<vmem>>, vector<8x512xf32>
    tpu.vector_store %arg6[%c0_27, %c0_28], %108 {strides = array<i32>} : memref<8x512xf32, #tpu.memory_space<vmem>>, vector<8x512xf32>,
    return
  }
  func.func @transform_0(%arg0: i32) -> (i32, i32) {
    %c0_i32 = arith.constant 0 : i32
    %c0_i32_0 = arith.constant 0 : i32
    return %arg0, %c0_i32 : i32, i32
  }
  func.func @transform_1(%arg0: i32) -> (i32, i32) {
    %c0_i32 = arith.constant 0 : i32
    %c0_i32_0 = arith.constant 0 : i32
    %c0_i32_1 = arith.constant 0 : i32
    return %c0_i32, %c0_i32_0 : i32, i32
  }
  func.func @transform_2(%arg0: i32) -> (i32, i32) {
    %c0_i32 = arith.constant 0 : i32
    %c0_i32_0 = arith.constant 0 : i32
    %c0_i32_1 = arith.constant 0 : i32
    return %c0_i32, %c0_i32_0 : i32, i32
  }
  func.func @transform_3(%arg0: i32) -> (i32, i32) {
    %c0_i32 = arith.constant 0 : i32
    %c0_i32_0 = arith.constant 0 : i32
    %c0_i32_1 = arith.constant 0 : i32
    return %c0_i32, %c0_i32_0 : i32, i32
  }
  func.func @transform_4(%arg0: i32) -> (i32, i32) {
    %c0_i32 = arith.constant 0 : i32
    %c0_i32_0 = arith.constant 0 : i32
    %c0_i32_1 = arith.constant 0 : i32
    return %c0_i32, %c0_i32_0 : i32, i32
  }
  func.func @transform_5(%arg0: i32) -> (i32, i32) {
    %c0_i32 = arith.constant 0 : i32
    %c0_i32_0 = arith.constant 0 : i32
    return %arg0, %c0_i32 : i32, i32
  }
}

</mosaic_0001>

<llo_original>
// kernel: tpu_custom_call.1
$region0: #{tpu_custom_call.1}
  #allocation0 [shape = 'u32[]', space=smem, size = 0x4, offset = 0x4, fixed_abs, tag = 'smem constant byte address 0x4 - core index']
  #allocation1 [shape = 'u32[144,128]{1,0:T(1,128)}', space=vmem, size = 0x12000, scoped, tag = 'internal scratch']
  %s0 = inlined_call_operand.hbm [shape: bf16[16,32], index: 0, kind: input, shape index: {}]
  %s1 = inlined_call_operand.hbm [shape: bf16[32,1536], index: 1, kind: input, shape index: {}]
  %s2 = inlined_call_operand.hbm [shape: f32[1,1536], index: 2, kind: input, shape index: {}]
  %s3 = inlined_call_operand.hbm [shape: bf16[512,512], index: 3, kind: input, shape index: {}]
  %s4 = inlined_call_operand.vmem [shape: f32[1,512], index: 4, kind: input, shape index: {}]
  %s5 = inlined_call_operand.hbm [shape: f32[16,512], index: 5, kind: output, shape index: {}]
  %s6 = sld [smem:[#allocation0]]
  $region69: #{tpu_custom_call.1} parent=0
    _
  %s8 = ssub.s32 1, %s6
  %s9 = scalar_select 0, %s8, %s6
  $region1: #{tpu_custom_call.1} parent=0
    #allocation2 [shape = 'u8[4096]{0}', space=vmem, size = 0x1000, scoped, tag = 'input window, operand 0']
    #allocation3 [shape = 's32[2]{0}', space=sflag, size = 0x8, scoped, tag = 'scoped memory for tpu_custom_call.1']
    #allocation4 [shape = 's32[2]{0}', space=sflag, size = 0x8, scoped, tag = 'scoped memory for tpu_custom_call.1']
    #allocation5 [shape = 'u8[98304]{0}', space=vmem, size = 0x18000, scoped, tag = 'input window, operand 1, single buffered']
    #allocation6 [shape = 's32[1]{0}', space=sflag, size = 0x4, scoped, tag = 'scoped memory for tpu_custom_call.1']
    #allocation7 [shape = 'u8[6144]{0}', space=vmem, size = 0x1800, scoped, tag = 'input window, operand 2, single buffered']
    #allocation8 [shape = 'u8[524288]{0}', space=vmem, size = 0x80000, scoped, tag = 'input window, operand 3, single buffered']
    #allocation9 [shape = 's32[1]{0}', space=sflag, size = 0x4, scoped, tag = 'scoped memory for tpu_custom_call.1']
    #allocation10 [shape = 'u8[32768]{0}', space=vmem, size = 0x8000, scoped, tag = 'output window, operand 0']
    %10 = vsyncpa [#allocation3], 0
    %s11 = scalar_lea.sflag [#allocation3], 1
    %12 = vsyncpa %s11, 0
    %13 = vsyncpa [#allocation6], 0
    %14 = vsyncpa [#allocation9], 0
    %15 = vsyncpa [#allocation4], 0
    %s16 = scalar_lea.sflag [#allocation4], 1
    %17 = vsyncpa %s16, 0
    loop: start=0, step=1, limit=4
    $region2: #{tpu_custom_call.1} parent=1 // loop_pre_header
      _
    $region3: #{tpu_custom_call.1} parent=1 // loop_header
      %s19 = sphi 0, %s23
      %p20 = scmp.ge.s32.totalorder %s19, 4
      %s29 = sphi 0, %s31
      %s32 = sphi 0, %s29
      %s33 = sphi 0, %s32
      %s49 = sphi 0, %s33
      %s53 = sphi 0, %s53
      %s55 = sphi 0, %s53
      %s56 = sphi 0, %s55
      %s70 = sphi 0, %s56
      %s74 = sphi 0, %s74
      %s76 = sphi 0, %s74
      %s77 = sphi 0, %s76
      %s91 = sphi 0, %s77
      %s95 = sphi 0, %s95
      %s97 = sphi 0, %s95
      %s98 = sphi 0, %s97
      %s112 = sphi 0, %s98
      %s116 = sphi 0, %s116
      %s118 = sphi 0, %s116
      %s119 = sphi 0, %s118
      %s133 = sphi 0, %s119
      %s139 = sphi 0, %s141
      %s142 = sphi 0, %s139
      %s143 = sphi 0, %s142
      %s159 = sphi 0, %s143
    $region4: #{tpu_custom_call.1} parent=1 // loop_header_branch
      %22 = sbr.rel (%p20) target = $region8
    $region5: #{tpu_custom_call.1} parent=1 // loop_body
      %s24 = ssub.s32 %s19, 1
      %s25 = ssub.s32 %s19, 2
      %s26 = sadd.s32 %s19, 1
      %s27 = ssub.s32 %s19, %s26
      %p28 = scmp.eq.s32.totalorder %s27, 0
      %s30 = sadd.s32 %s29, 1
      %s31 = scalar_select %p28, %s29, %s30
      %p34 = pneg %p28
      %p35 = scmp.eq.s32.totalorder %s19, 1
      %p36 = por %p34, %p35
      %p37 = scmp.ne.s32.totalorder %s29, %s32
      %p38 = scmp.eq.s32.totalorder %s19, 0
      %p39 = por %p37, %p38
      %p40 = scmp.ne.s32.totalorder %s29, %s32
      %p41 = scmp.eq.s32.totalorder %s24, 1
      %p42 = por %p40, %p41
      %p43 = scmp.ne.s32.totalorder %s32, %s33
      %p44 = scmp.eq.s32.totalorder %s24, 0
      %p45 = por %p43, %p44
      %p46 = scmp.ne.s32.totalorder %s32, %s33
      %p47 = scmp.eq.s32.totalorder %s25, 1
      %p48 = por %p46, %p47
      %p50 = scmp.ne.s32.totalorder %s33, %s49
      %p51 = scmp.eq.s32.totalorder %s25, 0
      %p52 = por %p50, %p51
      %s54 = sadd.s32 %s53, 1
      %p57 = scmp.eq.s32.totalorder %s19, 1
      %p58 = scmp.ne.s32.totalorder %s53, %s55
      %p59 = scmp.eq.s32.totalorder %s19, 0
      %p60 = por %p58, %p59
      %p61 = scmp.ne.s32.totalorder %s53, %s55
      %p62 = scmp.eq.s32.totalorder %s24, 1
      %p63 = por %p61, %p62
      %p64 = scmp.ne.s32.totalorder %s55, %s56
      %p65 = scmp.eq.s32.totalorder %s24, 0
      %p66 = por %p64, %p65
      %p67 = scmp.ne.s32.totalorder %s55, %s56
      %p68 = scmp.eq.s32.totalorder %s25, 1
      %p69 = por %p67, %p68
      %p71 = scmp.ne.s32.totalorder %s56, %s70
      %p72 = scmp.eq.s32.totalorder %s25, 0
      %p73 = por %p71, %p72
      %s75 = sadd.s32 %s74, 1
      %p78 = scmp.eq.s32.totalorder %s19, 1
      %p79 = scmp.ne.s32.totalorder %s74, %s76
      %p80 = scmp.eq.s32.totalorder %s19, 0
      %p81 = por %p79, %p80
      %p82 = scmp.ne.s32.totalorder %s74, %s76
      %p83 = scmp.eq.s32.totalorder %s24, 1
      %p84 = por %p82, %p83
      %p85 = scmp.ne.s32.totalorder %s76, %s77
      %p86 = scmp.eq.s32.totalorder %s24, 0
      %p87 = por %p85, %p86
      %p88 = scmp.ne.s32.totalorder %s76, %s77
      %p89 = scmp.eq.s32.totalorder %s25, 1
      %p90 = por %p88, %p89
      %p92 = scmp.ne.s32.totalorder %s77, %s91
      %p93 = scmp.eq.s32.totalorder %s25, 0
      %p94 = por %p92, %p93
      %s96 = sadd.s32 %s95, 1
      %p99 = scmp.eq.s32.totalorder %s19, 1
      %p100 = scmp.ne.s32.totalorder %s95, %s97
      %p101 = scmp.eq.s32.totalorder %s19, 0
      %p102 = por %p100, %p101
      %p103 = scmp.ne.s32.totalorder %s95, %s97
      %p104 = scmp.eq.s32.totalorder %s24, 1
      %p105 = por %p103, %p104
      %p106 = scmp.ne.s32.totalorder %s97, %s98
      %p107 = scmp.eq.s32.totalorder %s24, 0
      %p108 = por %p106, %p107
      %p109 = scmp.ne.s32.totalorder %s97, %s98
      %p110 = scmp.eq.s32.totalorder %s25, 1
      %p111 = por %p109, %p110
      %p113 = scmp.ne.s32.totalorder %s98, %s112
      %p114 = scmp.eq.s32.totalorder %s25, 0
      %p115 = por %p113, %p114
      %s117 = sadd.s32 %s116, 1
      %p120 = scmp.eq.s32.totalorder %s19, 1
      %p121 = scmp.ne.s32.totalorder %s116, %s118
      %p122 = scmp.eq.s32.totalorder %s19, 0
      %p123 = por %p121, %p122
      %p124 = scmp.ne.s32.totalorder %s116, %s118
      %p125 = scmp.eq.s32.totalorder %s24, 1
      %p126 = por %p124, %p125
      %p127 = scmp.ne.s32.totalorder %s118, %s119
      %p128 = scmp.eq.s32.totalorder %s24, 0
      %p129 = por %p127, %p128
      %p130 = scmp.ne.s32.totalorder %s118, %s119
      %p131 = scmp.eq.s32.totalorder %s25, 1
      %p132 = por %p130, %p131
      %p134 = scmp.ne.s32.totalorder %s119, %s133
      %p135 = scmp.eq.s32.totalorder %s25, 0
      %p136 = por %p134, %p135
      %s137 = ssub.s32 %s19, %s26
      %p138 = scmp.eq.s32.totalorder %s137, 0
      %s140 = sadd.s32 %s139, 1
      %s141 = scalar_select %p138, %s139, %s140
      %p144 = pneg %p138
      %p145 = scmp.eq.s32.totalorder %s19, 1
      %p146 = por %p144, %p145
      %p147 = scmp.ne.s32.totalorder %s139, %s142
      %p148 = scmp.eq.s32.totalorder %s19, 0
      %p149 = por %p147, %p148
      %p150 = scmp.ne.s32.totalorder %s139, %s142
      %p151 = scmp.eq.s32.totalorder %s24, 1
      %p152 = por %p150, %p151
      %p153 = scmp.ne.s32.totalorder %s142, %s143
      %p154 = scmp.eq.s32.totalorder %s24, 0
      %p155 = por %p153, %p154
      %p156 = scmp.ne.s32.totalorder %s142, %s143
      %p157 = scmp.eq.s32.totalorder %s25, 1
      %p158 = por %p156, %p157
      %p160 = scmp.ne.s32.totalorder %s143, %s159
      %p161 = scmp.eq.s32.totalorder %s25, 0
      %p162 = por %p160, %p161
      %p163 = scmp.le.s32.totalorder 1, %s19
      %p164 = scmp.lt.s32.totalorder %s19, 3
      %p165 = pnand %p163, %p164
      %p166 = pneg %p165
      // Predicated region
      $region9: #{tpu_custom_call.1} parent=5 // pred_check
        _
      $region10: #{tpu_custom_call.1} parent=5 // pred_check_branch
        %168 = sbr.rel (%p165) target = $region12
      $region11: #{tpu_custom_call.1} parent=5 // pred_region
        %s169 = ssub.s32 %s19, 1
        // Predicated region
        $region13: #{tpu_custom_call.1} parent=11 // pred_check
          %p170 = pneg %p66
        $region14: #{tpu_custom_call.1} parent=11 // pred_check_branch
          %172 = sbr.rel (%p170) target = $region16
        $region15: #{tpu_custom_call.1} parent=11 // pred_region
          %s174 = ssub.s32 3072, 3072
          %175 = vsyncadd [#allocation6], %s174
          %s176 = sshll.u32 [#allocation5], 4
          %s177 = int_to_ptr.vmem [resolvable:$true] %s176
          %182 = dma.hbm_to_vmem [thread:$0]  %s1, 3072, %s177, [#allocation6], 768, 768, 48
        $region16: #{tpu_custom_call.1} parent=11 // pred_fallthru
          _
        // Predicated region
        $region17: #{tpu_custom_call.1} parent=11 // pred_check
          %p183 = pneg %p87
        $region18: #{tpu_custom_call.1} parent=11 // pred_check_branch
          %185 = sbr.rel (%p183) target = $region20
        $region19: #{tpu_custom_call.1} parent=11 // pred_region
          %s187 = ssub.s32 192, 192
          %188 = vsyncadd [#allocation6], %s187
          %s190 = sshll.u32 [#allocation7], 4
          %s191 = int_to_ptr.vmem [resolvable:$true] %s190
          %193 = dma.hbm_to_vmem [thread:$0]  %s2, 192, %s191, [#allocation6]
        $region20: #{tpu_custom_call.1} parent=11 // pred_fallthru
          _
        // Predicated region
        $region21: #{tpu_custom_call.1} parent=11 // pred_check
          %p194 = pneg %p108
        $region22: #{tpu_custom_call.1} parent=11 // pred_check_branch
          %196 = sbr.rel (%p194) target = $region24
        $region23: #{tpu_custom_call.1} parent=11 // pred_region
          %s198 = ssub.s32 16384, 16384
          %199 = vsyncadd [#allocation9], %s198
          %s200 = sshll.u32 [#allocation8], 4
          %s201 = int_to_ptr.vmem [resolvable:$true] %s200
          %206 = dma.hbm_to_vmem [thread:$0]  %s3, 16384, %s201, [#allocation9], 256, 256, 16
        $region24: #{tpu_custom_call.1} parent=11 // pred_fallthru
          _
        // Predicated region
        $region25: #{tpu_custom_call.1} parent=11 // pred_check
          %p207 = pneg %p129
        $region26: #{tpu_custom_call.1} parent=11 // pred_check_branch
          %209 = sbr.rel (%p207) target = $region28
        $region27: #{tpu_custom_call.1} parent=11 // pred_region
          _
        $region28: #{tpu_custom_call.1} parent=11 // pred_fallthru
          _
      $region12: #{tpu_custom_call.1} parent=5 // pred_fallthru
        _
      %p210 = scmp.lt.s32.totalorder %s19, 2
      // Predicated region
      $region29: #{tpu_custom_call.1} parent=5 // pred_check
        %p211 = pneg %p210
      $region30: #{tpu_custom_call.1} parent=5 // pred_check_branch
        %213 = sbr.rel (%p211) target = $region32
      $region31: #{tpu_custom_call.1} parent=5 // pred_region
        // Predicated region
        $region33: #{tpu_custom_call.1} parent=31 // pred_check
          %p214 = pneg %p39
        $region34: #{tpu_custom_call.1} parent=31 // pred_check_branch
          %216 = sbr.rel (%p214) target = $region36
        $region35: #{tpu_custom_call.1} parent=31 // pred_region
          %s217 = sand.u32 %s29, 1
          %s218 = scalar_lea.sflag [#allocation3], %s217
          %s219 = sand.u32 %s29, 1
          %s220 = smul.addr %s219, 4
          %s221 = scalar_lea.vmem [#allocation2], %s220
          %s223 = ssub.s32 64, 64
          %224 = vsyncadd %s218, %s223
          %s225 = smul.addr %s19, 64
          %s226 = scalar_lea.hbm %s0, %s225
          %s228 = sshll.u32 %s221, 4
          %s229 = int_to_ptr.vmem [resolvable:$true] %s228
          %231 = dma.hbm_to_vmem [thread:$0]  %s226, 64, %s229, %s218
        $region36: #{tpu_custom_call.1} parent=31 // pred_fallthru
          _
      $region32: #{tpu_custom_call.1} parent=5 // pred_fallthru
        _
      %p232 = scmp.le.s32.totalorder 1, %s19
      %p233 = scmp.lt.s32.totalorder %s19, 3
      %p234 = pnand %p232, %p233
      %p235 = pneg %p234
      // Predicated region
      $region37: #{tpu_custom_call.1} parent=5 // pred_check
        _
      $region38: #{tpu_custom_call.1} parent=5 // pred_check_branch
        %237 = sbr.rel (%p234) target = $region40
      $region39: #{tpu_custom_call.1} parent=5 // pred_region
        %s238 = ssub.s32 %s19, 1
        %s239 = sand.u32 %s32, 1
        %s240 = scalar_lea.sflag [#allocation3], %s239
        %s241 = sand.u32 %s32, 1
        %s242 = smul.addr %s241, 4
        %s243 = scalar_lea.vmem [#allocation2], %s242
        // Predicated region
        $region41: #{tpu_custom_call.1} parent=39 // pred_check
          %p244 = pneg %p45
        $region42: #{tpu_custom_call.1} parent=39 // pred_check_branch
          %246 = sbr.rel (%p244) target = $region44
        $region43: #{tpu_custom_call.1} parent=39 // pred_region
          %247 = dma.done %s240, 64
        $region44: #{tpu_custom_call.1} parent=39 // pred_fallthru
          _
        // Predicated region
        $region45: #{tpu_custom_call.1} parent=39 // pred_check
          %p248 = pneg %p66
        $region46: #{tpu_custom_call.1} parent=39 // pred_check_branch
          %250 = sbr.rel (%p248) target = $region48
        $region47: #{tpu_custom_call.1} parent=39 // pred_region
          %251 = dma.done [#allocation6], 3072
        $region48: #{tpu_custom_call.1} parent=39 // pred_fallthru
          _
        // Predicated region
        $region49: #{tpu_custom_call.1} parent=39 // pred_check
          %p252 = pneg %p87
        $region50: #{tpu_custom_call.1} parent=39 // pred_check_branch
          %254 = sbr.rel (%p252) target = $region52
        $region51: #{tpu_custom_call.1} parent=39 // pred_region
          %255 = dma.done [#allocation6], 192
        $region52: #{tpu_custom_call.1} parent=39 // pred_fallthru
          _
        // Predicated region
        $region53: #{tpu_custom_call.1} parent=39 // pred_check
          %p256 = pneg %p108
        $region54: #{tpu_custom_call.1} parent=39 // pred_check_branch
          %258 = sbr.rel (%p256) target = $region56
        $region55: #{tpu_custom_call.1} parent=39 // pred_region
          %259 = dma.done [#allocation9], 16384
        $region56: #{tpu_custom_call.1} parent=39 // pred_fallthru
          _
        %s260 = sand.u32 %s32, 1
        %s261 = scalar_lea.sflag [#allocation3], %s260
        %s262 = sand.u32 %s32, 1
        %s263 = smul.addr %s262, 4
        %s264 = scalar_lea.vmem [#allocation2], %s263
        %p265 = pneg %p45
        %p266 = pneg %p42
        %p267 = pneg %p66
        %p268 = pneg %p63
        %p269 = pneg %p87
        %p270 = pneg %p84
        %p271 = pneg %p108
        %p272 = pneg %p105
        %p273 = pneg %p129
        %p274 = pneg %p126
        %p275 = pneg %p155
        %p276 = pneg %p152
        %s277 = sand.u32 %s142, 1
        %s278 = scalar_lea.sflag [#allocation4], %s277
        %s279 = sand.u32 %s142, 1
        %s280 = smul.addr %s279, 32
        %s281 = scalar_lea.vmem [#allocation10], %s280
        %v283 = vld [vmem:[%s243] sm:$0xf]
        %v284 = vld [vmem:[#allocation5] sm:$0xff]
        %v285 = vld [vmem:[#allocation5 + $0x8] sm:$0xff]
        %v286 = vld [vmem:[#allocation5 + $0x10] sm:$0xff]
        %v287 = vld [vmem:[#allocation5 + $0x18] sm:$0xff]
        %v288 = vld [vmem:[#allocation5 + $0x20] sm:$0xff]
        %v289 = vld [vmem:[#allocation5 + $0x28] sm:$0xff]
        %v290 = vld [vmem:[#allocation5 + $0x30] sm:$0xff]
        %v291 = vld [vmem:[#allocation5 + $0x38] sm:$0xff]
        %v292 = vld [vmem:[#allocation5 + $0x40] sm:$0xff]
        %v293 = vld [vmem:[#allocation5 + $0x48] sm:$0xff]
        %v294 = vld [vmem:[#allocation5 + $0x50] sm:$0xff]
        %v295 = vld [vmem:[#allocation5 + $0x58] sm:$0xff]
        %v296 = vld [vmem:[#allocation5 + $0x60] sm:$0xff]
        %v297 = vld [vmem:[#allocation5 + $0x68] sm:$0xff]
        %v298 = vld [vmem:[#allocation5 + $0x70] sm:$0xff]
        %v299 = vld [vmem:[#allocation5 + $0x78] sm:$0xff]
        %v300 = vld [vmem:[#allocation5 + $0x80] sm:$0xff]
        %v301 = vld [vmem:[#allocation5 + $0x88] sm:$0xff]
        %v302 = vld [vmem:[#allocation5 + $0x90] sm:$0xff]
        %v303 = vld [vmem:[#allocation5 + $0x98] sm:$0xff]
        %v304 = vld [vmem:[#allocation5 + $0xa0] sm:$0xff]
        %v305 = vld [vmem:[#allocation5 + $0xa8] sm:$0xff]
        %v306 = vld [vmem:[#allocation5 + $0xb0] sm:$0xff]
        %v307 = vld [vmem:[#allocation5 + $0xb8] sm:$0xff]
        %v308 = vld [vmem:[#allocation7] sm:$0xff]
        %v309 = vld [vmem:[#allocation7 + $0x8] sm:$0xf]
        %v312 = vlaneseq
        %v313 = vshrl.u32 %v312, 7
        %v314 = vsub.s32 0, %v313
        %v315 = vrot.slane %v308, %v314
        %v316 = vlaneseq
        %v317 = vshrl.u32 %v316, 7
        %v318 = vsub.s32 1, %v317
        %v319 = vrot.slane %v308, %v318
        %v320 = vlaneseq
        %v321 = vshrl.u32 %v320, 7
        %v322 = vsub.s32 2, %v321
        %v323 = vrot.slane %v308, %v322
        %v324 = vlaneseq
        %v325 = vshrl.u32 %v324, 7
        %v326 = vsub.s32 3, %v325
        %v327 = vrot.slane %v308, %v326
        %v328 = vlaneseq
        %v329 = vshrl.u32 %v328, 7
        %v330 = vsub.s32 4, %v329
        %v331 = vrot.slane %v308, %v330
        %v332 = vlaneseq
        %v333 = vshrl.u32 %v332, 7
        %v334 = vsub.s32 5, %v333
        %v335 = vrot.slane %v308, %v334
        %v336 = vlaneseq
        %v337 = vshrl.u32 %v336, 7
        %v338 = vsub.s32 6, %v337
        %v339 = vrot.slane %v308, %v338
        %v340 = vlaneseq
        %v341 = vshrl.u32 %v340, 7
        %v342 = vsub.s32 7, %v341
        %v343 = vrot.slane %v308, %v342
        %v344 = vlaneseq
        %v345 = vshrl.u32 %v344, 7
        %v346 = vsub.s32 0, %v345
        %v347 = vrot.slane %v309, %v346
        %v348 = vlaneseq
        %v349 = vshrl.u32 %v348, 7
        %v350 = vsub.s32 1, %v349
        %v351 = vrot.slane %v309, %v350
        %v352 = vlaneseq
        %v353 = vshrl.u32 %v352, 7
        %v354 = vsub.s32 2, %v353
        %v355 = vrot.slane %v309, %v354
        %v356 = vlaneseq
        %v357 = vshrl.u32 %v356, 7
        %v358 = vsub.s32 3, %v357
        %v359 = vrot.slane %v309, %v358
        %v396 = vunpack.c.l.b16 %v284
        %v397 = vunpack.c.h.b16 %v284
        %v398 = vunpack.c.l.b16 %v285
        %v399 = vunpack.c.h.b16 %v285
        %v400 = vunpack.c.l.b16 %v286
        %v401 = vunpack.c.h.b16 %v286
        %v402 = vunpack.c.l.b16 %v287
        %v403 = vunpack.c.h.b16 %v287
        %v404 = vunpack.c.l.b16 %v288
        %v405 = vunpack.c.h.b16 %v288
        %v406 = vunpack.c.l.b16 %v289
        %v407 = vunpack.c.h.b16 %v289
        %v408 = vunpack.c.l.b16 %v290
        %v409 = vunpack.c.h.b16 %v290
        %v410 = vunpack.c.l.b16 %v291
        %v411 = vunpack.c.h.b16 %v291
        %v412 = vunpack.c.l.b16 %v292
        %v413 = vunpack.c.h.b16 %v292
        %v414 = vunpack.c.l.b16 %v293
        %v415 = vunpack.c.h.b16 %v293
        %v416 = vunpack.c.l.b16 %v294
        %v417 = vunpack.c.h.b16 %v294
        %v418 = vunpack.c.l.b16 %v295
        %v419 = vunpack.c.h.b16 %v295
        %v420 = vunpack.c.l.b16 %v296
        %v421 = vunpack.c.h.b16 %v296
        %v422 = vunpack.c.l.b16 %v297
        %v423 = vunpack.c.h.b16 %v297
        %v424 = vunpack.c.l.b16 %v298
        %v425 = vunpack.c.h.b16 %v298
        %v426 = vunpack.c.l.b16 %v299
        %v427 = vunpack.c.h.b16 %v299
        %v428 = vunpack.c.l.b16 %v300
        %v429 = vunpack.c.h.b16 %v300
        %v430 = vunpack.c.l.b16 %v301
        %v431 = vunpack.c.h.b16 %v301
        %v432 = vunpack.c.l.b16 %v302
        %v433 = vunpack.c.h.b16 %v302
        %v434 = vunpack.c.l.b16 %v303
        %v435 = vunpack.c.h.b16 %v303
        %v436 = vunpack.c.l.b16 %v304
        %v437 = vunpack.c.h.b16 %v304
        %v438 = vunpack.c.l.b16 %v305
        %v439 = vunpack.c.h.b16 %v305
        %v440 = vunpack.c.l.b16 %v306
        %v441 = vunpack.c.h.b16 %v306
        %v442 = vunpack.c.l.b16 %v307
        %v443 = vunpack.c.h.b16 %v307
        %v444 = vpack.c.b16 %v408, %v396
        %v445 = vpack.c.b16 %v409, %v397
        %v446 = vpack.c.b16 %v410, %v398
        %v447 = vpack.c.b16 %v411, %v399
        %v448 = vpack.c.b16 %v412, %v400
        %v449 = vpack.c.b16 %v413, %v401
        %v450 = vpack.c.b16 %v414, %v402
        %v451 = vpack.c.b16 %v415, %v403
        %v452 = vpack.c.b16 %v416, %v404
        %v453 = vpack.c.b16 %v417, %v405
        %v454 = vpack.c.b16 %v418, %v406
        %v455 = vpack.c.b16 %v419, %v407
        %v456 = vpack.c.b16 %v432, %v420
        %v457 = vpack.c.b16 %v433, %v421
        %v458 = vpack.c.b16 %v434, %v422
        %v459 = vpack.c.b16 %v435, %v423
        %v460 = vpack.c.b16 %v436, %v424
        %v461 = vpack.c.b16 %v437, %v425
        %v462 = vpack.c.b16 %v438, %v426
        %v463 = vpack.c.b16 %v439, %v427
        %v464 = vpack.c.b16 %v440, %v428
        %v465 = vpack.c.b16 %v441, %v429
        %v466 = vpack.c.b16 %v442, %v430
        %v467 = vpack.c.b16 %v443, %v431
        %vm492 = vcmask 261120
        %v494 = vsel %vm492, %v283, 0
        %496 = vmatprep.subr.bf16.mxu0 %v445
        %497 = vmatpush1.bf16.msra.mxu0 %v444
        %498 = vmatprep.subr.bf16.mxu0 %v457
        %499 = vmatpush1.bf16.msra.mxu0 %v456
        %500 = vmatprep.subr.bf16.mxu0 0
        %501 = vmatpush1.bf16.msra.mxu0 0
        %502 = vmatprep.subr.bf16.mxu0 0
        %503 = vmatpush1.bf16.msra.mxu0 0
        %504 = vmatprep.subr.bf16.mxu0 0
        %505 = vmatpush1.bf16.msra.mxu0 0
        %506 = vmatprep.subr.bf16.mxu0 0
        %507 = vmatpush1.bf16.msra.mxu0 0
        %508 = vmatprep.subr.bf16.mxu0 0
        %509 = vmatpush1.bf16.msra.mxu0 0
        %510 = vmatprep.subr.bf16.mxu0 0
        %511 = vmatpush1.bf16.msra.mxu0 0
        %512 = vmatprep.subr.bf16.mxu0 0
        %513 = vmatpush1.bf16.msra.mxu0 0
        %514 = vmatprep.subr.bf16.mxu0 0
        %515 = vmatpush1.bf16.msra.mxu0 0
        %516 = vmatprep.subr.bf16.mxu0 0
        %517 = vmatpush1.bf16.msra.mxu0 0
        %518 = vmatprep.subr.bf16.mxu0 0
        %519 = vmatpush1.bf16.msra.mxu0 0
        %520 = vmatprep.subr.bf16.mxu0 0
        %521 = vmatpush1.bf16.msra.mxu0 0
        %522 = vmatprep.subr.bf16.mxu0 0
        %523 = vmatpush1.bf16.msra.mxu0 0
        %524 = vmatprep.subr.bf16.mxu0 0
        %525 = vmatpush1.bf16.msra.mxu0 0
        %526 = vmatprep.subr.bf16.mxu0 0
        %527 = vmatpush1.bf16.msra.mxu0 0
        %528 = vmatprep.mubr.bf16.mxu0 0
        %529 = vmatmul.mubr.bf16.gmra.mrb[0].mxu0 %v494
        %v530 = vpop.f32.mrb[0].mxu0
        %v531 = vadd.f32 %v315, %v530
        %v532 = vpop.f32.mrb[0].mxu0
        %v533 = vadd.f32 %v319, %v532
        %v534 = vpop.f32.mrb[0].mxu0
        %v535 = vpop.f32.mrb[0].mxu0
        %536 = vdwg.mxu0
        %537 = vmatprep.subr.bf16.mxu0 %v447
        %538 = vmatpush1.bf16.msra.mxu0 %v446
        %539 = vmatprep.subr.bf16.mxu0 %v459
        %540 = vmatpush1.bf16.msra.mxu0 %v458
        %541 = vmatprep.subr.bf16.mxu0 0
        %542 = vmatpush1.bf16.msra.mxu0 0
        %543 = vmatprep.subr.bf16.mxu0 0
        %544 = vmatpush1.bf16.msra.mxu0 0
        %545 = vmatprep.subr.bf16.mxu0 0
        %546 = vmatpush1.bf16.msra.mxu0 0
        %547 = vmatprep.subr.bf16.mxu0 0
        %548 = vmatpush1.bf16.msra.mxu0 0
        %549 = vmatprep.subr.bf16.mxu0 0
        %550 = vmatpush1.bf16.msra.mxu0 0
        %551 = vmatprep.subr.bf16.mxu0 0
        %552 = vmatpush1.bf16.msra.mxu0 0
        %553 = vmatprep.subr.bf16.mxu0 0
        %554 = vmatpush1.bf16.msra.mxu0 0
        %555 = vmatprep.subr.bf16.mxu0 0
        %556 = vmatpush1.bf16.msra.mxu0 0
        %557 = vmatprep.subr.bf16.mxu0 0
        %558 = vmatpush1.bf16.msra.mxu0 0
        %559 = vmatprep.subr.bf16.mxu0 0
        %560 = vmatpush1.bf16.msra.mxu0 0
        %561 = vmatprep.subr.bf16.mxu0 0
        %562 = vmatpush1.bf16.msra.mxu0 0
        %563 = vmatprep.subr.bf16.mxu0 0
        %564 = vmatpush1.bf16.msra.mxu0 0
        %565 = vmatprep.subr.bf16.mxu0 0
        %566 = vmatpush1.bf16.msra.mxu0 0
        %567 = vmatprep.subr.bf16.mxu0 0
        %568 = vmatpush1.bf16.msra.mxu0 0
        %569 = vmatprep.mubr.bf16.mxu0 0
        %570 = vmatmul.mubr.bf16.gmra.mrb[0].mxu0 %v494
        %v571 = vpop.f32.mrb[0].mxu0
        %v572 = vadd.f32 %v323, %v571
        %v573 = vpop.f32.mrb[0].mxu0
        %v574 = vadd.f32 %v327, %v573
        %v575 = vpop.f32.mrb[0].mxu0
        %v576 = vpop.f32.mrb[0].mxu0
        %577 = vdwg.mxu0
        %578 = vmatprep.subr.bf16.mxu0 %v449
        %579 = vmatpush1.bf16.msra.mxu0 %v448
        %580 = vmatprep.subr.bf16.mxu0 %v461
        %581 = vmatpush1.bf16.msra.mxu0 %v460
        %582 = vmatprep.subr.bf16.mxu0 0
        %583 = vmatpush1.bf16.msra.mxu0 0
        %584 = vmatprep.subr.bf16.mxu0 0
        %585 = vmatpush1.bf16.msra.mxu0 0
        %586 = vmatprep.subr.bf16.mxu0 0
        %587 = vmatpush1.bf16.msra.mxu0 0
        %588 = vmatprep.subr.bf16.mxu0 0
        %589 = vmatpush1.bf16.msra.mxu0 0
        %590 = vmatprep.subr.bf16.mxu0 0
        %591 = vmatpush1.bf16.msra.mxu0 0
        %592 = vmatprep.subr.bf16.mxu0 0
        %593 = vmatpush1.bf16.msra.mxu0 0
        %594 = vmatprep.subr.bf16.mxu0 0
        %595 = vmatpush1.bf16.msra.mxu0 0
        %596 = vmatprep.subr.bf16.mxu0 0
        %597 = vmatpush1.bf16.msra.mxu0 0
        %598 = vmatprep.subr.bf16.mxu0 0
        %599 = vmatpush1.bf16.msra.mxu0 0
        %600 = vmatprep.subr.bf16.mxu0 0
        %601 = vmatpush1.bf16.msra.mxu0 0
        %602 = vmatprep.subr.bf16.mxu0 0
        %603 = vmatpush1.bf16.msra.mxu0 0
        %604 = vmatprep.subr.bf16.mxu0 0
        %605 = vmatpush1.bf16.msra.mxu0 0
        %606 = vmatprep.subr.bf16.mxu0 0
        %607 = vmatpush1.bf16.msra.mxu0 0
        %608 = vmatprep.subr.bf16.mxu0 0
        %609 = vmatpush1.bf16.msra.mxu0 0
        %610 = vmatprep.mubr.bf16.mxu0 0
        %611 = vmatmul.mubr.bf16.gmra.mrb[0].mxu0 %v494
        %v612 = vpop.f32.mrb[0].mxu0
        %v613 = vadd.f32 %v331, %v612
        %v614 = vpop.f32.mrb[0].mxu0
        %v615 = vadd.f32 %v335, %v614
        %v616 = vpop.f32.mrb[0].mxu0
        %v617 = vpop.f32.mrb[0].mxu0
        %618 = vdwg.mxu0
        %619 = vmatprep.subr.bf16.mxu0 %v451
        %620 = vmatpush1.bf16.msra.mxu0 %v450
        %621 = vmatprep.subr.bf16.mxu0 %v463
        %622 = vmatpush1.bf16.msra.mxu0 %v462
        %623 = vmatprep.subr.bf16.mxu0 0
        %624 = vmatpush1.bf16.msra.mxu0 0
        %625 = vmatprep.subr.bf16.mxu0 0
        %626 = vmatpush1.bf16.msra.mxu0 0
        %627 = vmatprep.subr.bf16.mxu0 0
        %628 = vmatpush1.bf16.msra.mxu0 0
        %629 = vmatprep.subr.bf16.mxu0 0
        %630 = vmatpush1.bf16.msra.mxu0 0
        %631 = vmatprep.subr.bf16.mxu0 0
        %632 = vmatpush1.bf16.msra.mxu0 0
        %633 = vmatprep.subr.bf16.mxu0 0
        %634 = vmatpush1.bf16.msra.mxu0 0
        %635 = vmatprep.subr.bf16.mxu0 0
        %636 = vmatpush1.bf16.msra.mxu0 0
        %637 = vmatprep.subr.bf16.mxu0 0
        %638 = vmatpush1.bf16.msra.mxu0 0
        %639 = vmatprep.subr.bf16.mxu0 0
        %640 = vmatpush1.bf16.msra.mxu0 0
        %641 = vmatprep.subr.bf16.mxu0 0
        %642 = vmatpush1.bf16.msra.mxu0 0
        %643 = vmatprep.subr.bf16.mxu0 0
        %644 = vmatpush1.bf16.msra.mxu0 0
        %645 = vmatprep.subr.bf16.mxu0 0
        %646 = vmatpush1.bf16.msra.mxu0 0
        %647 = vmatprep.subr.bf16.mxu0 0
        %648 = vmatpush1.bf16.msra.mxu0 0
        %649 = vmatprep.subr.bf16.mxu0 0
        %650 = vmatpush1.bf16.msra.mxu0 0
        %651 = vmatprep.mubr.bf16.mxu0 0
        %652 = vmatmul.mubr.bf16.gmra.mrb[0].mxu0 %v494
        %v653 = vpop.f32.mrb[0].mxu0
        %v654 = vadd.f32 %v339, %v653
        %v655 = vpop.f32.mrb[0].mxu0
        %v656 = vadd.f32 %v343, %v655
        %v657 = vpop.f32.mrb[0].mxu0
        %v658 = vpop.f32.mrb[0].mxu0
        %659 = vdwg.mxu0
        %660 = vmatprep.subr.bf16.mxu0 %v453
        %661 = vmatpush1.bf16.msra.mxu0 %v452
        %662 = vmatprep.subr.bf16.mxu0 %v465
        %663 = vmatpush1.bf16.msra.mxu0 %v464
        %664 = vmatprep.subr.bf16.mxu0 0
        %665 = vmatpush1.bf16.msra.mxu0 0
        %666 = vmatprep.subr.bf16.mxu0 0
        %667 = vmatpush1.bf16.msra.mxu0 0
        %668 = vmatprep.subr.bf16.mxu0 0
        %669 = vmatpush1.bf16.msra.mxu0 0
        %670 = vmatprep.subr.bf16.mxu0 0
        %671 = vmatpush1.bf16.msra.mxu0 0
        %672 = vmatprep.subr.bf16.mxu0 0
        %673 = vmatpush1.bf16.msra.mxu0 0
        %674 = vmatprep.subr.bf16.mxu0 0
        %675 = vmatpush1.bf16.msra.mxu0 0
        %676 = vmatprep.subr.bf16.mxu0 0
        %677 = vmatpush1.bf16.msra.mxu0 0
        %678 = vmatprep.subr.bf16.mxu0 0
        %679 = vmatpush1.bf16.msra.mxu0 0
        %680 = vmatprep.subr.bf16.mxu0 0
        %681 = vmatpush1.bf16.msra.mxu0 0
        %682 = vmatprep.subr.bf16.mxu0 0
        %683 = vmatpush1.bf16.msra.mxu0 0
        %684 = vmatprep.subr.bf16.mxu0 0
        %685 = vmatpush1.bf16.msra.mxu0 0
        %686 = vmatprep.subr.bf16.mxu0 0
        %687 = vmatpush1.bf16.msra.mxu0 0
        %688 = vmatprep.subr.bf16.mxu0 0
        %689 = vmatpush1.bf16.msra.mxu0 0
        %690 = vmatprep.subr.bf16.mxu0 0
        %691 = vmatpush1.bf16.msra.mxu0 0
        %692 = vmatprep.mubr.bf16.mxu0 0
        %693 = vmatmul.mubr.bf16.gmra.mrb[0].mxu0 %v494
        %v694 = vpop.f32.mrb[0].mxu0
        %v695 = vadd.f32 %v347, %v694
        %v696 = vpop.f32.mrb[0].mxu0
        %v697 = vadd.f32 %v351, %v696
        %v698 = vpop.f32.mrb[0].mxu0
        %v699 = vpop.f32.mrb[0].mxu0
        %700 = vdwg.mxu0
        %701 = vmatprep.subr.bf16.mxu0 %v455
        %702 = vmatpush1.bf16.msra.mxu0 %v454
        %703 = vmatprep.subr.bf16.mxu0 %v467
        %704 = vmatpush1.bf16.msra.mxu0 %v466
        %705 = vmatprep.subr.bf16.mxu0 0
        %706 = vmatpush1.bf16.msra.mxu0 0
        %707 = vmatprep.subr.bf16.mxu0 0
        %708 = vmatpush1.bf16.msra.mxu0 0
        %709 = vmatprep.subr.bf16.mxu0 0
        %710 = vmatpush1.bf16.msra.mxu0 0
        %711 = vmatprep.subr.bf16.mxu0 0
        %712 = vmatpush1.bf16.msra.mxu0 0
        %713 = vmatprep.subr.bf16.mxu0 0
        %714 = vmatpush1.bf16.msra.mxu0 0
        %715 = vmatprep.subr.bf16.mxu0 0
        %716 = vmatpush1.bf16.msra.mxu0 0
        %717 = vmatprep.subr.bf16.mxu0 0
        %718 = vmatpush1.bf16.msra.mxu0 0
        %719 = vmatprep.subr.bf16.mxu0 0
        %720 = vmatpush1.bf16.msra.mxu0 0
        %721 = vmatprep.subr.bf16.mxu0 0
        %722 = vmatpush1.bf16.msra.mxu0 0
        %723 = vmatprep.subr.bf16.mxu0 0
        %724 = vmatpush1.bf16.msra.mxu0 0
        %725 = vmatprep.subr.bf16.mxu0 0
        %726 = vmatpush1.bf16.msra.mxu0 0
        %727 = vmatprep.subr.bf16.mxu0 0
        %728 = vmatpush1.bf16.msra.mxu0 0
        %729 = vmatprep.subr.bf16.mxu0 0
        %730 = vmatpush1.bf16.msra.mxu0 0
        %731 = vmatprep.subr.bf16.mxu0 0
        %732 = vmatpush1.bf16.msra.mxu0 0
        %733 = vmatprep.mubr.bf16.mxu0 0
        %734 = vmatmul.mubr.bf16.gmra.mrb[0].mxu0 %v494
        %v735 = vpop.f32.mrb[0].mxu0
        %v736 = vadd.f32 %v355, %v735
        %v737 = vpop.f32.mrb[0].mxu0
        %v738 = vadd.f32 %v359, %v737
        %v739 = vpop.f32.mrb[0].mxu0
        %v740 = vpop.f32.mrb[0].mxu0
        %741 = vdwg.mxu0
        %v742 = vpack.c.bf16 %v531, %v531
        %v743 = vpack.c.bf16 %v613, %v613
        %744 = vmatprep.subr.bf16.mxu0 0
        %745 = vmatpush1.bf16.xpose.msra.mxu0 %v743
        %746 = vmatprep.subr.bf16.mxu0 0
        %747 = vmatpush1.bf16.xpose.msra.mxu0 0
        %748 = vmatprep.subr.bf16.mxu0 0
        %749 = vmatpush1.bf16.xpose.msra.mxu0 0
        %750 = vmatprep.subr.bf16.mxu0 0
        %751 = vmatpush1.bf16.xpose.msra.mxu0 0
        %752 = vmatprep.subr.bf16.mxu0 0
        %753 = vmatpush1.bf16.xpose.msra.mxu0 0
        %754 = vmatprep.subr.bf16.mxu0 0
        %755 = vmatpush1.bf16.xpose.msra.mxu0 0
        %756 = vmatprep.subr.bf16.mxu0 0
        %757 = vmatpush1.bf16.xpose.msra.mxu0 0
        %758 = vmatprep.subr.bf16.mxu0 0
        %759 = vmatpush1.bf16.xpose.msra.mxu0 0
        %760 = vmatprep.subr.bf16.mxu0 0
        %761 = vmatpush1.bf16.xpose.msra.mxu0 0
        %762 = vmatprep.subr.bf16.mxu0 0
        %763 = vmatpush1.bf16.xpose.msra.mxu0 0
        %764 = vmatprep.subr.bf16.mxu0 0
        %765 = vmatpush1.bf16.xpose.msra.mxu0 0
        %766 = vmatprep.subr.bf16.mxu0 0
        %767 = vmatpush1.bf16.xpose.msra.mxu0 0
        %768 = vmatprep.subr.bf16.mxu0 0
        %769 = vmatpush1.bf16.xpose.msra.mxu0 0
        %770 = vmatprep.subr.bf16.mxu0 0
        %771 = vmatpush1.bf16.xpose.msra.mxu0 0
        %772 = vmatprep.subr.bf16.mxu0 0
        %773 = vmatpush1.bf16.xpose.msra.mxu0 0
        %774 = vmatprep.subr.bf16.mxu0 0
        %775 = vmatpush1.bf16.xpose.msra.mxu0 0
        %776 = vmatprep.mubr.bf16.mxu0 0
        %777 = vmatmul.mubr.bf16.gmra.mrb[0].mxu0 %v742
        %v778 = vpop.f32.mrb[0].mxu0
        %v779 = vadd.f32 0.0, %v778
        %v780 = vpop.f32.mrb[0].mxu0
        %v781 = vpop.f32.mrb[0].mxu0
        %v782 = vpop.f32.mrb[0].mxu0
        %783 = vdwg.mxu0
        %vm784 = vcmask 64512
        %v785 = vsel %vm784, %v779, -inf
        %786 = vmax.xlane.f32.xlu0 %v785
        %v787 = vpop.xlane.xlu0 %786
        %v788 = vsub.f32 %v779, %v787
        %v789 = vmul.f32 %v788, 1.442695
        %v790 = vpow.pop %v789
        %v791 = vsel %vm784, %v790, 0.0
        %792 = vadd.xlane.f32.xlu0 %v791
        %v793 = vpop.xlane.xlu0 %792
        %v794 = vrcp.pop %v793
        %v795 = vmul.f32 %v790, %v794
        %v796 = vpack.c.bf16 %v795, %v795
        %v797 = vpack.c.bf16 %v695, %v695
        %v799 = vsel %vm784, %v796, 0
        %vm801 = vcmask 1043456
        %v803 = vsel %vm801, %v797, 0
        %805 = vmatprep.subr.bf16.mxu0 0
        %806 = vmatpush1.bf16.msra.mxu0 %v803
        %807 = vmatprep.subr.bf16.mxu0 0
        %808 = vmatpush1.bf16.msra.mxu0 0
        %809 = vmatprep.subr.bf16.mxu0 0
        %810 = vmatpush1.bf16.msra.mxu0 0
        %811 = vmatprep.subr.bf16.mxu0 0
        %812 = vmatpush1.bf16.msra.mxu0 0
        %813 = vmatprep.subr.bf16.mxu0 0
        %814 = vmatpush1.bf16.msra.mxu0 0
        %815 = vmatprep.subr.bf16.mxu0 0
        %816 = vmatpush1.bf16.msra.mxu0 0
        %817 = vmatprep.subr.bf16.mxu0 0
        %818 = vmatpush1.bf16.msra.mxu0 0
        %819 = vmatprep.subr.bf16.mxu0 0
        %820 = vmatpush1.bf16.msra.mxu0 0
        %821 = vmatprep.subr.bf16.mxu0 0
        %822 = vmatpush1.bf16.msra.mxu0 0
        %823 = vmatprep.subr.bf16.mxu0 0
        %824 = vmatpush1.bf16.msra.mxu0 0
        %825 = vmatprep.subr.bf16.mxu0 0
        %826 = vmatpush1.bf16.msra.mxu0 0
        %827 = vmatprep.subr.bf16.mxu0 0
        %828 = vmatpush1.bf16.msra.mxu0 0
        %829 = vmatprep.subr.bf16.mxu0 0
        %830 = vmatpush1.bf16.msra.mxu0 0
        %831 = vmatprep.subr.bf16.mxu0 0
        %832 = vmatpush1.bf16.msra.mxu0 0
        %833 = vmatprep.subr.bf16.mxu0 0
        %834 = vmatpush1.bf16.msra.mxu0 0
        %835 = vmatprep.subr.bf16.mxu0 0
        %836 = vmatpush1.bf16.msra.mxu0 0
        %837 = vmatprep.mubr.bf16.mxu0 0
        %838 = vmatmul.mubr.bf16.gmra.mrb[0].mxu0 %v799
        %v839 = vpop.f32.mrb[0].mxu0
        %v840 = vadd.f32 0.0, %v839
        %v841 = vpop.f32.mrb[0].mxu0
        %v842 = vpop.f32.mrb[0].mxu0
        %v843 = vpop.f32.mrb[0].mxu0
        %844 = vdwg.mxu0
        %v845 = vadd.f32 %v531, %v840
        %v846 = vpack.c.bf16 %v533, %v533
        %v847 = vpack.c.bf16 %v615, %v615
        %848 = vmatprep.subr.bf16.mxu0 0
        %849 = vmatpush1.bf16.xpose.msra.mxu0 %v847
        %850 = vmatprep.subr.bf16.mxu0 0
        %851 = vmatpush1.bf16.xpose.msra.mxu0 0
        %852 = vmatprep.subr.bf16.mxu0 0
        %853 = vmatpush1.bf16.xpose.msra.mxu0 0
        %854 = vmatprep.subr.bf16.mxu0 0
        %855 = vmatpush1.bf16.xpose.msra.mxu0 0
        %856 = vmatprep.subr.bf16.mxu0 0
        %857 = vmatpush1.bf16.xpose.msra.mxu0 0
        %858 = vmatprep.subr.bf16.mxu0 0
        %859 = vmatpush1.bf16.xpose.msra.mxu0 0
        %860 = vmatprep.subr.bf16.mxu0 0
        %861 = vmatpush1.bf16.xpose.msra.mxu0 0
        %862 = vmatprep.subr.bf16.mxu0 0
        %863 = vmatpush1.bf16.xpose.msra.mxu0 0
        %864 = vmatprep.subr.bf16.mxu0 0
        %865 = vmatpush1.bf16.xpose.msra.mxu0 0
        %866 = vmatprep.subr.bf16.mxu0 0
        %867 = vmatpush1.bf16.xpose.msra.mxu0 0
        %868 = vmatprep.subr.bf16.mxu0 0
        %869 = vmatpush1.bf16.xpose.msra.mxu0 0
        %870 = vmatprep.subr.bf16.mxu0 0
        %871 = vmatpush1.bf16.xpose.msra.mxu0 0
        %872 = vmatprep.subr.bf16.mxu0 0
        %873 = vmatpush1.bf16.xpose.msra.mxu0 0
        %874 = vmatprep.subr.bf16.mxu0 0
        %875 = vmatpush1.bf16.xpose.msra.mxu0 0
        %876 = vmatprep.subr.bf16.mxu0 0
        %877 = vmatpush1.bf16.xpose.msra.mxu0 0
        %878 = vmatprep.subr.bf16.mxu0 0
        %879 = vmatpush1.bf16.xpose.msra.mxu0 0
        %880 = vmatprep.mubr.bf16.mxu0 0
        %881 = vmatmul.mubr.bf16.gmra.mrb[0].mxu0 %v846
        %v882 = vpop.f32.mrb[0].mxu0
        %v883 = vadd.f32 0.0, %v882
        %v884 = vpop.f32.mrb[0].mxu0
        %v885 = vpop.f32.mrb[0].mxu0
        %v886 = vpop.f32.mrb[0].mxu0
        %887 = vdwg.mxu0
        %v888 = vsel %vm784, %v883, -inf
        %889 = vmax.xlane.f32.xlu0 %v888
        %v890 = vpop.xlane.xlu0 %889
        %v891 = vsub.f32 %v883, %v890
        %v892 = vmul.f32 %v891, 1.442695
        %v893 = vpow.pop %v892
        %v894 = vsel %vm784, %v893, 0.0
        %895 = vadd.xlane.f32.xlu0 %v894
        %v896 = vpop.xlane.xlu0 %895
        %v897 = vrcp.pop %v896
        %v898 = vmul.f32 %v893, %v897
        %v899 = vpack.c.bf16 %v898, %v898
        %v900 = vpack.c.bf16 %v697, %v697
        %v902 = vsel %vm784, %v899, 0
        %v905 = vsel %vm801, %v900, 0
        %907 = vmatprep.subr.bf16.mxu0 0
        %908 = vmatpush1.bf16.msra.mxu0 %v905
        %909 = vmatprep.subr.bf16.mxu0 0
        %910 = vmatpush1.bf16.msra.mxu0 0
        %911 = vmatprep.subr.bf16.mxu0 0
        %912 = vmatpush1.bf16.msra.mxu0 0
        %913 = vmatprep.subr.bf16.mxu0 0
        %914 = vmatpush1.bf16.msra.mxu0 0
        %915 = vmatprep.subr.bf16.mxu0 0
        %916 = vmatpush1.bf16.msra.mxu0 0
        %917 = vmatprep.subr.bf16.mxu0 0
        %918 = vmatpush1.bf16.msra.mxu0 0
        %919 = vmatprep.subr.bf16.mxu0 0
        %920 = vmatpush1.bf16.msra.mxu0 0
        %921 = vmatprep.subr.bf16.mxu0 0
        %922 = vmatpush1.bf16.msra.mxu0 0
        %923 = vmatprep.subr.bf16.mxu0 0
        %924 = vmatpush1.bf16.msra.mxu0 0
        %925 = vmatprep.subr.bf16.mxu0 0
        %926 = vmatpush1.bf16.msra.mxu0 0
        %927 = vmatprep.subr.bf16.mxu0 0
        %928 = vmatpush1.bf16.msra.mxu0 0
        %929 = vmatprep.subr.bf16.mxu0 0
        %930 = vmatpush1.bf16.msra.mxu0 0
        %931 = vmatprep.subr.bf16.mxu0 0
        %932 = vmatpush1.bf16.msra.mxu0 0
        %933 = vmatprep.subr.bf16.mxu0 0
        %934 = vmatpush1.bf16.msra.mxu0 0
        %935 = vmatprep.subr.bf16.mxu0 0
        %936 = vmatpush1.bf16.msra.mxu0 0
        %937 = vmatprep.subr.bf16.mxu0 0
        %938 = vmatpush1.bf16.msra.mxu0 0
        %939 = vmatprep.mubr.bf16.mxu0 0
        %940 = vmatmul.mubr.bf16.gmra.mrb[0].mxu0 %v902
        %v941 = vpop.f32.mrb[0].mxu0
        %v942 = vadd.f32 0.0, %v941
        %v943 = vpop.f32.mrb[0].mxu0
        %v944 = vpop.f32.mrb[0].mxu0
        %v945 = vpop.f32.mrb[0].mxu0
        %946 = vdwg.mxu0
        %v947 = vadd.f32 %v533, %v942
        %v948 = vpack.c.bf16 %v572, %v572
        %v949 = vpack.c.bf16 %v654, %v654
        %950 = vmatprep.subr.bf16.mxu0 0
        %951 = vmatpush1.bf16.xpose.msra.mxu0 %v949
        %952 = vmatprep.subr.bf16.mxu0 0
        %953 = vmatpush1.bf16.xpose.msra.mxu0 0
        %954 = vmatprep.subr.bf16.mxu0 0
        %955 = vmatpush1.bf16.xpose.msra.mxu0 0
        %956 = vmatprep.subr.bf16.mxu0 0
        %957 = vmatpush1.bf16.xpose.msra.mxu0 0
        %958 = vmatprep.subr.bf16.mxu0 0
        %959 = vmatpush1.bf16.xpose.msra.mxu0 0
        %960 = vmatprep.subr.bf16.mxu0 0
        %961 = vmatpush1.bf16.xpose.msra.mxu0 0
        %962 = vmatprep.subr.bf16.mxu0 0
        %963 = vmatpush1.bf16.xpose.msra.mxu0 0
        %964 = vmatprep.subr.bf16.mxu0 0
        %965 = vmatpush1.bf16.xpose.msra.mxu0 0
        %966 = vmatprep.subr.bf16.mxu0 0
        %967 = vmatpush1.bf16.xpose.msra.mxu0 0
        %968 = vmatprep.subr.bf16.mxu0 0
        %969 = vmatpush1.bf16.xpose.msra.mxu0 0
        %970 = vmatprep.subr.bf16.mxu0 0
        %971 = vmatpush1.bf16.xpose.msra.mxu0 0
        %972 = vmatprep.subr.bf16.mxu0 0
        %973 = vmatpush1.bf16.xpose.msra.mxu0 0
        %974 = vmatprep.subr.bf16.mxu0 0
        %975 = vmatpush1.bf16.xpose.msra.mxu0 0
        %976 = vmatprep.subr.bf16.mxu0 0
        %977 = vmatpush1.bf16.xpose.msra.mxu0 0
        %978 = vmatprep.subr.bf16.mxu0 0
        %979 = vmatpush1.bf16.xpose.msra.mxu0 0
        %980 = vmatprep.subr.bf16.mxu0 0
        %981 = vmatpush1.bf16.xpose.msra.mxu0 0
        %982 = vmatprep.mubr.bf16.mxu0 0
        %983 = vmatmul.mubr.bf16.gmra.mrb[0].mxu0 %v948
        %v984 = vpop.f32.mrb[0].mxu0
        %v985 = vadd.f32 0.0, %v984
        %v986 = vpop.f32.mrb[0].mxu0
        %v987 = vpop.f32.mrb[0].mxu0
        %v988 = vpop.f32.mrb[0].mxu0
        %989 = vdwg.mxu0
        %v990 = vsel %vm784, %v985, -inf
        %991 = vmax.xlane.f32.xlu0 %v990
        %v992 = vpop.xlane.xlu0 %991
        %v993 = vsub.f32 %v985, %v992
        %v994 = vmul.f32 %v993, 1.442695
        %v995 = vpow.pop %v994
        %v996 = vsel %vm784, %v995, 0.0
        %997 = vadd.xlane.f32.xlu0 %v996
        %v998 = vpop.xlane.xlu0 %997
        %v999 = vrcp.pop %v998
        %v1000 = vmul.f32 %v995, %v999
        %v1001 = vpack.c.bf16 %v1000, %v1000
        %v1002 = vpack.c.bf16 %v736, %v736
        %v1004 = vsel %vm784, %v1001, 0
        %v1007 = vsel %vm801, %v1002, 0
        %1009 = vmatprep.subr.bf16.mxu0 0
        %1010 = vmatpush1.bf16.msra.mxu0 %v1007
        %1011 = vmatprep.subr.bf16.mxu0 0
        %1012 = vmatpush1.bf16.msra.mxu0 0
        %1013 = vmatprep.subr.bf16.mxu0 0
        %1014 = vmatpush1.bf16.msra.mxu0 0
        %1015 = vmatprep.subr.bf16.mxu0 0
        %1016 = vmatpush1.bf16.msra.mxu0 0
        %1017 = vmatprep.subr.bf16.mxu0 0
        %1018 = vmatpush1.bf16.msra.mxu0 0
        %1019 = vmatprep.subr.bf16.mxu0 0
        %1020 = vmatpush1.bf16.msra.mxu0 0
        %1021 = vmatprep.subr.bf16.mxu0 0
        %1022 = vmatpush1.bf16.msra.mxu0 0
        %1023 = vmatprep.subr.bf16.mxu0 0
        %1024 = vmatpush1.bf16.msra.mxu0 0
        %1025 = vmatprep.subr.bf16.mxu0 0
        %1026 = vmatpush1.bf16.msra.mxu0 0
        %1027 = vmatprep.subr.bf16.mxu0 0
        %1028 = vmatpush1.bf16.msra.mxu0 0
        %1029 = vmatprep.subr.bf16.mxu0 0
        %1030 = vmatpush1.bf16.msra.mxu0 0
        %1031 = vmatprep.subr.bf16.mxu0 0
        %1032 = vmatpush1.bf16.msra.mxu0 0
        %1033 = vmatprep.subr.bf16.mxu0 0
        %1034 = vmatpush1.bf16.msra.mxu0 0
        %1035 = vmatprep.subr.bf16.mxu0 0
        %1036 = vmatpush1.bf16.msra.mxu0 0
        %1037 = vmatprep.subr.bf16.mxu0 0
        %1038 = vmatpush1.bf16.msra.mxu0 0
        %1039 = vmatprep.subr.bf16.mxu0 0
        %1040 = vmatpush1.bf16.msra.mxu0 0
        %1041 = vmatprep.mubr.bf16.mxu0 0
        %1042 = vmatmul.mubr.bf16.gmra.mrb[0].mxu0 %v1004
        %v1043 = vpop.f32.mrb[0].mxu0
        %v1044 = vadd.f32 0.0, %v1043
        %v1045 = vpop.f32.mrb[0].mxu0
        %v1046 = vpop.f32.mrb[0].mxu0
        %v1047 = vpop.f32.mrb[0].mxu0
        %1048 = vdwg.mxu0
        %v1049 = vadd.f32 %v572, %v1044
        %v1050 = vpack.c.bf16 %v574, %v574
        %v1051 = vpack.c.bf16 %v656, %v656
        %1052 = vmatprep.subr.bf16.mxu0 0
        %1053 = vmatpush1.bf16.xpose.msra.mxu0 %v1051
        %1054 = vmatprep.subr.bf16.mxu0 0
        %1055 = vmatpush1.bf16.xpose.msra.mxu0 0
        %1056 = vmatprep.subr.bf16.mxu0 0
        %1057 = vmatpush1.bf16.xpose.msra.mxu0 0
        %1058 = vmatprep.subr.bf16.mxu0 0
        %1059 = vmatpush1.bf16.xpose.msra.mxu0 0
        %1060 = vmatprep.subr.bf16.mxu0 0
        %1061 = vmatpush1.bf16.xpose.msra.mxu0 0
        %1062 = vmatprep.subr.bf16.mxu0 0
        %1063 = vmatpush1.bf16.xpose.msra.mxu0 0
        %1064 = vmatprep.subr.bf16.mxu0 0
        %1065 = vmatpush1.bf16.xpose.msra.mxu0 0
        %1066 = vmatprep.subr.bf16.mxu0 0
        %1067 = vmatpush1.bf16.xpose.msra.mxu0 0
        %1068 = vmatprep.subr.bf16.mxu0 0
        %1069 = vmatpush1.bf16.xpose.msra.mxu0 0
        %1070 = vmatprep.subr.bf16.mxu0 0
        %1071 = vmatpush1.bf16.xpose.msra.mxu0 0
        %1072 = vmatprep.subr.bf16.mxu0 0
        %1073 = vmatpush1.bf16.xpose.msra.mxu0 0
        %1074 = vmatprep.subr.bf16.mxu0 0
        %1075 = vmatpush1.bf16.xpose.msra.mxu0 0
        %1076 = vmatprep.subr.bf16.mxu0 0
        %1077 = vmatpush1.bf16.xpose.msra.mxu0 0
        %1078 = vmatprep.subr.bf16.mxu0 0
        %1079 = vmatpush1.bf16.xpose.msra.mxu0 0
        %1080 = vmatprep.subr.bf16.mxu0 0
        %1081 = vmatpush1.bf16.xpose.msra.mxu0 0
        %1082 = vmatprep.subr.bf16.mxu0 0
        %1083 = vmatpush1.bf16.xpose.msra.mxu0 0
        %1084 = vmatprep.mubr.bf16.mxu0 0
        %1085 = vmatmul.mubr.bf16.gmra.mrb[0].mxu0 %v1050
        %v1086 = vpop.f32.mrb[0].mxu0
        %v1087 = vadd.f32 0.0, %v1086
        %v1088 = vpop.f32.mrb[0].mxu0
        %v1089 = vpop.f32.mrb[0].mxu0
        %v1090 = vpop.f32.mrb[0].mxu0
        %1091 = vdwg.mxu0
        %v1092 = vsel %vm784, %v1087, -inf
        %1093 = vmax.xlane.f32.xlu0 %v1092
        %v1094 = vpop.xlane.xlu0 %1093
        %v1095 = vsub.f32 %v1087, %v1094
        %v1096 = vmul.f32 %v1095, 1.442695
        %v1097 = vpow.pop %v1096
        %v1098 = vsel %vm784, %v1097, 0.0
        %1099 = vadd.xlane.f32.xlu0 %v1098
        %v1100 = vpop.xlane.xlu0 %1099
        %v1101 = vrcp.pop %v1100
        %v1102 = vmul.f32 %v1097, %v1101
        %v1103 = vpack.c.bf16 %v1102, %v1102
        %v1104 = vpack.c.bf16 %v738, %v738
        %v1106 = vsel %vm784, %v1103, 0
        %v1109 = vsel %vm801, %v1104, 0
        %1111 = vmatprep.subr.bf16.mxu0 0
        %1112 = vmatpush1.bf16.msra.mxu0 %v1109
        %1113 = vmatprep.subr.bf16.mxu0 0
        %1114 = vmatpush1.bf16.msra.mxu0 0
        %1115 = vmatprep.subr.bf16.mxu0 0
        %1116 = vmatpush1.bf16.msra.mxu0 0
        %1117 = vmatprep.subr.bf16.mxu0 0
        %1118 = vmatpush1.bf16.msra.mxu0 0
        %1119 = vmatprep.subr.bf16.mxu0 0
        %1120 = vmatpush1.bf16.msra.mxu0 0
        %1121 = vmatprep.subr.bf16.mxu0 0
        %1122 = vmatpush1.bf16.msra.mxu0 0
        %1123 = vmatprep.subr.bf16.mxu0 0
        %1124 = vmatpush1.bf16.msra.mxu0 0
        %1125 = vmatprep.subr.bf16.mxu0 0
        %1126 = vmatpush1.bf16.msra.mxu0 0
        %1127 = vmatprep.subr.bf16.mxu0 0
        %1128 = vmatpush1.bf16.msra.mxu0 0
        %1129 = vmatprep.subr.bf16.mxu0 0
        %1130 = vmatpush1.bf16.msra.mxu0 0
        %1131 = vmatprep.subr.bf16.mxu0 0
        %1132 = vmatpush1.bf16.msra.mxu0 0
        %1133 = vmatprep.subr.bf16.mxu0 0
        %1134 = vmatpush1.bf16.msra.mxu0 0
        %1135 = vmatprep.subr.bf16.mxu0 0
        %1136 = vmatpush1.bf16.msra.mxu0 0
        %1137 = vmatprep.subr.bf16.mxu0 0
        %1138 = vmatpush1.bf16.msra.mxu0 0
        %1139 = vmatprep.subr.bf16.mxu0 0
        %1140 = vmatpush1.bf16.msra.mxu0 0
        %1141 = vmatprep.subr.bf16.mxu0 0
        %1142 = vmatpush1.bf16.msra.mxu0 0
        %1143 = vmatprep.mubr.bf16.mxu0 0
        %1144 = vmatmul.mubr.bf16.gmra.mrb[0].mxu0 %v1106
        %v1145 = vpop.f32.mrb[0].mxu0
        %v1146 = vadd.f32 0.0, %v1145
        %v1147 = vpop.f32.mrb[0].mxu0
        %v1148 = vpop.f32.mrb[0].mxu0
        %v1149 = vpop.f32.mrb[0].mxu0
        %1150 = vdwg.mxu0
        %v1151 = vadd.f32 %v574, %v1146
        %v1152 = vpack.c.bf16 %v845, %v845
        %v1153 = vpack.c.bf16 %v947, %v947
        %v1154 = vpack.c.bf16 %v1049, %v1049
        %v1155 = vpack.c.bf16 %v1151, %v1151
        %v1156 = vld [vmem:[#allocation8] sm:$0xff]
        %v1157 = vld [vmem:[#allocation8 + $0x8] sm:$0xff]
        %v1158 = vld [vmem:[#allocation8 + $0x10] sm:$0xff]
        %v1159 = vld [vmem:[#allocation8 + $0x18] sm:$0xff]
        %v1160 = vld [vmem:[#allocation8 + $0x20] sm:$0xff]
        %v1161 = vld [vmem:[#allocation8 + $0x28] sm:$0xff]
        %v1162 = vld [vmem:[#allocation8 + $0x30] sm:$0xff]
        %v1163 = vld [vmem:[#allocation8 + $0x38] sm:$0xff]
        %v1164 = vld [vmem:[#allocation8 + $0x40] sm:$0xff]
        %v1165 = vld [vmem:[#allocation8 + $0x48] sm:$0xff]
        %v1166 = vld [vmem:[#allocation8 + $0x50] sm:$0xff]
        %v1167 = vld [vmem:[#allocation8 + $0x58] sm:$0xff]
        %v1168 = vld [vmem:[#allocation8 + $0x60] sm:$0xff]
        %v1169 = vld [vmem:[#allocation8 + $0x68] sm:$0xff]
        %v1170 = vld [vmem:[#allocation8 + $0x70] sm:$0xff]
        %v1171 = vld [vmem:[#allocation8 + $0x78] sm:$0xff]
        %v1172 = vld [vmem:[#allocation8 + $0x80] sm:$0xff]
        %v1173 = vld [vmem:[#allocation8 + $0x88] sm:$0xff]
        %v1174 = vld [vmem:[#allocation8 + $0x90] sm:$0xff]
        %v1175 = vld [vmem:[#allocation8 + $0x98] sm:$0xff]
        %v1176 = vld [vmem:[#allocation8 + $0xa0] sm:$0xff]
        %v1177 = vld [vmem:[#allocation8 + $0xa8] sm:$0xff]
        %v1178 = vld [vmem:[#allocation8 + $0xb0] sm:$0xff]
        %v1179 = vld [vmem:[#allocation8 + $0xb8] sm:$0xff]
        %v1180 = vld [vmem:[#allocation8 + $0xc0] sm:$0xff]
        %v1181 = vld [vmem:[#allocation8 + $0xc8] sm:$0xff]
        %v1182 = vld [vmem:[#allocation8 + $0xd0] sm:$0xff]
        %v1183 = vld [vmem:[#allocation8 + $0xd8] sm:$0xff]
        %v1184 = vld [vmem:[#allocation8 + $0xe0] sm:$0xff]
        %v1185 = vld [vmem:[#allocation8 + $0xe8] sm:$0xff]
        %v1186 = vld [vmem:[#allocation8 + $0xf0] sm:$0xff]
        %v1187 = vld [vmem:[#allocation8 + $0xf8] sm:$0xff]
        %v1188 = vld [vmem:[#allocation8 + $0x100] sm:$0xff]
        %v1189 = vld [vmem:[#allocation8 + $0x108] sm:$0xff]
        %v1190 = vld [vmem:[#allocation8 + $0x110] sm:$0xff]
        %v1191 = vld [vmem:[#allocation8 + $0x118] sm:$0xff]
        %v1192 = vld [vmem:[#allocation8 + $0x120] sm:$0xff]
        %v1193 = vld [vmem:[#allocation8 + $0x128] sm:$0xff]
        %v1194 = vld [vmem:[#allocation8 + $0x130] sm:$0xff]
        %v1195 = vld [vmem:[#allocation8 + $0x138] sm:$0xff]
        %v1196 = vld [vmem:[#allocation8 + $0x140] sm:$0xff]
        %v1197 = vld [vmem:[#allocation8 + $0x148] sm:$0xff]
        %v1198 = vld [vmem:[#allocation8 + $0x150] sm:$0xff]
        %v1199 = vld [vmem:[#allocation8 + $0x158] sm:$0xff]
        %v1200 = vld [vmem:[#allocation8 + $0x160] sm:$0xff]
        %v1201 = vld [vmem:[#allocation8 + $0x168] sm:$0xff]
        %v1202 = vld [vmem:[#allocation8 + $0x170] sm:$0xff]
        %v1203 = vld [vmem:[#allocation8 + $0x178] sm:$0xff]
        %v1204 = vld [vmem:[#allocation8 + $0x180] sm:$0xff]
        %v1205 = vld [vmem:[#allocation8 + $0x188] sm:$0xff]
        %v1206 = vld [vmem:[#allocation8 + $0x190] sm:$0xff]
        %v1207 = vld [vmem:[#allocation8 + $0x198] sm:$0xff]
        %v1208 = vld [vmem:[#allocation8 + $0x1a0] sm:$0xff]
        %v1209 = vld [vmem:[#allocation8 + $0x1a8] sm:$0xff]
        %v1210 = vld [vmem:[#allocation8 + $0x1b0] sm:$0xff]
        %v1211 = vld [vmem:[#allocation8 + $0x1b8] sm:$0xff]
        %v1212 = vld [vmem:[#allocation8 + $0x1c0] sm:$0xff]
        %v1213 = vld [vmem:[#allocation8 + $0x1c8] sm:$0xff]
        %v1214 = vld [vmem:[#allocation8 + $0x1d0] sm:$0xff]
        %v1215 = vld [vmem:[#allocation8 + $0x1d8] sm:$0xff]
        %v1216 = vld [vmem:[#allocation8 + $0x1e0] sm:$0xff]
        %v1217 = vld [vmem:[#allocation8 + $0x1e8] sm:$0xff]
        %v1218 = vld [vmem:[#allocation8 + $0x1f0] sm:$0xff]
        %v1219 = vld [vmem:[#allocation8 + $0x1f8] sm:$0xff]
        %v1220 = vld [vmem:[#allocation8 + $0x200] sm:$0xff]
        %v1221 = vld [vmem:[#allocation8 + $0x208] sm:$0xff]
        %v1222 = vld [vmem:[#allocation8 + $0x210] sm:$0xff]
        %v1223 = vld [vmem:[#allocation8 + $0x218] sm:$0xff]
        %v1224 = vld [vmem:[#allocation8 + $0x220] sm:$0xff]
        %v1225 = vld [vmem:[#allocation8 + $0x228] sm:$0xff]
        %v1226 = vld [vmem:[#allocation8 + $0x230] sm:$0xff]
        %v1227 = vld [vmem:[#allocation8 + $0x238] sm:$0xff]
        %v1228 = vld [vmem:[#allocation8 + $0x240] sm:$0xff]
        %v1229 = vld [vmem:[#allocation8 + $0x248] sm:$0xff]
        %v1230 = vld [vmem:[#allocation8 + $0x250] sm:$0xff]
        %v1231 = vld [vmem:[#allocation8 + $0x258] sm:$0xff]
        %v1232 = vld [vmem:[#allocation8 + $0x260] sm:$0xff]
        %v1233 = vld [vmem:[#allocation8 + $0x268] sm:$0xff]
        %v1234 = vld [vmem:[#allocation8 + $0x270] sm:$0xff]
        %v1235 = vld [vmem:[#allocation8 + $0x278] sm:$0xff]
        %v1236 = vld [vmem:[#allocation8 + $0x280] sm:$0xff]
        %v1237 = vld [vmem:[#allocation8 + $0x288] sm:$0xff]
        %v1238 = vld [vmem:[#allocation8 + $0x290] sm:$0xff]
        %v1239 = vld [vmem:[#allocation8 + $0x298] sm:$0xff]
        %v1240 = vld [vmem:[#allocation8 + $0x2a0] sm:$0xff]
        %v1241 = vld [vmem:[#allocation8 + $0x2a8] sm:$0xff]
        %v1242 = vld [vmem:[#allocation8 + $0x2b0] sm:$0xff]
        %v1243 = vld [vmem:[#allocation8 + $0x2b8] sm:$0xff]
        %v1244 = vld [vmem:[#allocation8 + $0x2c0] sm:$0xff]
        %v1245 = vld [vmem:[#allocation8 + $0x2c8] sm:$0xff]
        %v1246 = vld [vmem:[#allocation8 + $0x2d0] sm:$0xff]
        %v1247 = vld [vmem:[#allocation8 + $0x2d8] sm:$0xff]
        %v1248 = vld [vmem:[#allocation8 + $0x2e0] sm:$0xff]
        %v1249 = vld [vmem:[#allocation8 + $0x2e8] sm:$0xff]
        %v1250 = vld [vmem:[#allocation8 + $0x2f0] sm:$0xff]
        %v1251 = vld [vmem:[#allocation8 + $0x2f8] sm:$0xff]
        %v1252 = vld [vmem:[#allocation8 + $0x300] sm:$0xff]
        %v1253 = vld [vmem:[#allocation8 + $0x308] sm:$0xff]
        %v1254 = vld [vmem:[#allocation8 + $0x310] sm:$0xff]
        %v1255 = vld [vmem:[#allocation8 + $0x318] sm:$0xff]
        %v1256 = vld [vmem:[#allocation8 + $0x320] sm:$0xff]
        %v1257 = vld [vmem:[#allocation8 + $0x328] sm:$0xff]
        %v1258 = vld [vmem:[#allocation8 + $0x330] sm:$0xff]
        %v1259 = vld [vmem:[#allocation8 + $0x338] sm:$0xff]
        %v1260 = vld [vmem:[#allocation8 + $0x340] sm:$0xff]
        %v1261 = vld [vmem:[#allocation8 + $0x348] sm:$0xff]
        %v1262 = vld [vmem:[#allocation8 + $0x350] sm:$0xff]
        %v1263 = vld [vmem:[#allocation8 + $0x358] sm:$0xff]
        %v1264 = vld [vmem:[#allocation8 + $0x360] sm:$0xff]
        %v1265 = vld [vmem:[#allocation8 + $0x368] sm:$0xff]
        %v1266 = vld [vmem:[#allocation8 + $0x370] sm:$0xff]
        %v1267 = vld [vmem:[#allocation8 + $0x378] sm:$0xff]
        %v1268 = vld [vmem:[#allocation8 + $0x380] sm:$0xff]
        %v1269 = vld [vmem:[#allocation8 + $0x388] sm:$0xff]
        %v1270 = vld [vmem:[#allocation8 + $0x390] sm:$0xff]
        %v1271 = vld [vmem:[#allocation8 + $0x398] sm:$0xff]
        %v1272 = vld [vmem:[#allocation8 + $0x3a0] sm:$0xff]
        %v1273 = vld [vmem:[#allocation8 + $0x3a8] sm:$0xff]
        %v1274 = vld [vmem:[#allocation8 + $0x3b0] sm:$0xff]
        %v1275 = vld [vmem:[#allocation8 + $0x3b8] sm:$0xff]
        %v1276 = vld [vmem:[#allocation8 + $0x3c0] sm:$0xff]
        %v1277 = vld [vmem:[#allocation8 + $0x3c8] sm:$0xff]
        %v1278 = vld [vmem:[#allocation8 + $0x3d0] sm:$0xff]
        %v1279 = vld [vmem:[#allocation8 + $0x3d8] sm:$0xff]
        %v1280 = vld [vmem:[#allocation8 + $0x3e0] sm:$0xff]
        %v1281 = vld [vmem:[#allocation8 + $0x3e8] sm:$0xff]
        %v1282 = vld [vmem:[#allocation8 + $0x3f0] sm:$0xff]
        %v1283 = vld [vmem:[#allocation8 + $0x3f8] sm:$0xff]
        %v1284 = vld [vmem:[%s4] sm:$0xf]
        %v1286 = vlaneseq
        %v1287 = vshrl.u32 %v1286, 7
        %v1288 = vsub.s32 0, %v1287
        %v1289 = vrot.slane %v1284, %v1288
        %v1290 = vlaneseq
        %v1291 = vshrl.u32 %v1290, 7
        %v1292 = vsub.s32 1, %v1291
        %v1293 = vrot.slane %v1284, %v1292
        %v1294 = vlaneseq
        %v1295 = vshrl.u32 %v1294, 7
        %v1296 = vsub.s32 2, %v1295
        %v1297 = vrot.slane %v1284, %v1296
        %v1298 = vlaneseq
        %v1299 = vshrl.u32 %v1298, 7
        %v1300 = vsub.s32 3, %v1299
        %v1301 = vrot.slane %v1284, %v1300
        %v1434 = vunpack.c.l.b16 %v1156
        %v1435 = vunpack.c.h.b16 %v1156
        %v1436 = vunpack.c.l.b16 %v1157
        %v1437 = vunpack.c.h.b16 %v1157
        %v1438 = vunpack.c.l.b16 %v1158
        %v1439 = vunpack.c.h.b16 %v1158
        %v1440 = vunpack.c.l.b16 %v1159
        %v1441 = vunpack.c.h.b16 %v1159
        %v1442 = vunpack.c.l.b16 %v1160
        %v1443 = vunpack.c.h.b16 %v1160
        %v1444 = vunpack.c.l.b16 %v1161
        %v1445 = vunpack.c.h.b16 %v1161
        %v1446 = vunpack.c.l.b16 %v1162
        %v1447 = vunpack.c.h.b16 %v1162
        %v1448 = vunpack.c.l.b16 %v1163
        %v1449 = vunpack.c.h.b16 %v1163
        %v1450 = vunpack.c.l.b16 %v1164
        %v1451 = vunpack.c.h.b16 %v1164
        %v1452 = vunpack.c.l.b16 %v1165
        %v1453 = vunpack.c.h.b16 %v1165
        %v1454 = vunpack.c.l.b16 %v1166
        %v1455 = vunpack.c.h.b16 %v1166
        %v1456 = vunpack.c.l.b16 %v1167
        %v1457 = vunpack.c.h.b16 %v1167
        %v1458 = vunpack.c.l.b16 %v1168
        %v1459 = vunpack.c.h.b16 %v1168
        %v1460 = vunpack.c.l.b16 %v1169
        %v1461 = vunpack.c.h.b16 %v1169
        %v1462 = vunpack.c.l.b16 %v1170
        %v1463 = vunpack.c.h.b16 %v1170
        %v1464 = vunpack.c.l.b16 %v1171
        %v1465 = vunpack.c.h.b16 %v1171
        %v1466 = vunpack.c.l.b16 %v1172
        %v1467 = vunpack.c.h.b16 %v1172
        %v1468 = vunpack.c.l.b16 %v1173
        %v1469 = vunpack.c.h.b16 %v1173
        %v1470 = vunpack.c.l.b16 %v1174
        %v1471 = vunpack.c.h.b16 %v1174
        %v1472 = vunpack.c.l.b16 %v1175
        %v1473 = vunpack.c.h.b16 %v1175
        %v1474 = vunpack.c.l.b16 %v1176
        %v1475 = vunpack.c.h.b16 %v1176
        %v1476 = vunpack.c.l.b16 %v1177
        %v1477 = vunpack.c.h.b16 %v1177
        %v1478 = vunpack.c.l.b16 %v1178
        %v1479 = vunpack.c.h.b16 %v1178
        %v1480 = vunpack.c.l.b16 %v1179
        %v1481 = vunpack.c.h.b16 %v1179
        %v1482 = vunpack.c.l.b16 %v1180
        %v1483 = vunpack.c.h.b16 %v1180
        %v1484 = vunpack.c.l.b16 %v1181
        %v1485 = vunpack.c.h.b16 %v1181
        %v1486 = vunpack.c.l.b16 %v1182
        %v1487 = vunpack.c.h.b16 %v1182
        %v1488 = vunpack.c.l.b16 %v1183
        %v1489 = vunpack.c.h.b16 %v1183
        %v1490 = vunpack.c.l.b16 %v1184
        %v1491 = vunpack.c.h.b16 %v1184
        %v1492 = vunpack.c.l.b16 %v1185
        %v1493 = vunpack.c.h.b16 %v1185
        %v1494 = vunpack.c.l.b16 %v1186
        %v1495 = vunpack.c.h.b16 %v1186
        %v1496 = vunpack.c.l.b16 %v1187
        %v1497 = vunpack.c.h.b16 %v1187
        %v1498 = vunpack.c.l.b16 %v1188
        %v1499 = vunpack.c.h.b16 %v1188
        %v1500 = vunpack.c.l.b16 %v1189
        %v1501 = vunpack.c.h.b16 %v1189
        %v1502 = vunpack.c.l.b16 %v1190
        %v1503 = vunpack.c.h.b16 %v1190
        %v1504 = vunpack.c.l.b16 %v1191
        %v1505 = vunpack.c.h.b16 %v1191
        %v1506 = vunpack.c.l.b16 %v1192
        %v1507 = vunpack.c.h.b16 %v1192
        %v1508 = vunpack.c.l.b16 %v1193
        %v1509 = vunpack.c.h.b16 %v1193
        %v1510 = vunpack.c.l.b16 %v1194
        %v1511 = vunpack.c.h.b16 %v1194
        %v1512 = vunpack.c.l.b16 %v1195
        %v1513 = vunpack.c.h.b16 %v1195
        %v1514 = vunpack.c.l.b16 %v1196
        %v1515 = vunpack.c.h.b16 %v1196
        %v1516 = vunpack.c.l.b16 %v1197
        %v1517 = vunpack.c.h.b16 %v1197
        %v1518 = vunpack.c.l.b16 %v1198
        %v1519 = vunpack.c.h.b16 %v1198
        %v1520 = vunpack.c.l.b16 %v1199
        %v1521 = vunpack.c.h.b16 %v1199
        %v1522 = vunpack.c.l.b16 %v1200
        %v1523 = vunpack.c.h.b16 %v1200
        %v1524 = vunpack.c.l.b16 %v1201
        %v1525 = vunpack.c.h.b16 %v1201
        %v1526 = vunpack.c.l.b16 %v1202
        %v1527 = vunpack.c.h.b16 %v1202
        %v1528 = vunpack.c.l.b16 %v1203
        %v1529 = vunpack.c.h.b16 %v1203
        %v1530 = vunpack.c.l.b16 %v1204
        %v1531 = vunpack.c.h.b16 %v1204
        %v1532 = vunpack.c.l.b16 %v1205
        %v1533 = vunpack.c.h.b16 %v1205
        %v1534 = vunpack.c.l.b16 %v1206
        %v1535 = vunpack.c.h.b16 %v1206
        %v1536 = vunpack.c.l.b16 %v1207
        %v1537 = vunpack.c.h.b16 %v1207
        %v1538 = vunpack.c.l.b16 %v1208
        %v1539 = vunpack.c.h.b16 %v1208
        %v1540 = vunpack.c.l.b16 %v1209
        %v1541 = vunpack.c.h.b16 %v1209
        %v1542 = vunpack.c.l.b16 %v1210
        %v1543 = vunpack.c.h.b16 %v1210
        %v1544 = vunpack.c.l.b16 %v1211
        %v1545 = vunpack.c.h.b16 %v1211
        %v1546 = vunpack.c.l.b16 %v1212
        %v1547 = vunpack.c.h.b16 %v1212
        %v1548 = vunpack.c.l.b16 %v1213
        %v1549 = vunpack.c.h.b16 %v1213
        %v1550 = vunpack.c.l.b16 %v1214
        %v1551 = vunpack.c.h.b16 %v1214
        %v1552 = vunpack.c.l.b16 %v1215
        %v1553 = vunpack.c.h.b16 %v1215
        %v1554 = vunpack.c.l.b16 %v1216
        %v1555 = vunpack.c.h.b16 %v1216
        %v1556 = vunpack.c.l.b16 %v1217
        %v1557 = vunpack.c.h.b16 %v1217
        %v1558 = vunpack.c.l.b16 %v1218
        %v1559 = vunpack.c.h.b16 %v1218
        %v1560 = vunpack.c.l.b16 %v1219
        %v1561 = vunpack.c.h.b16 %v1219
        %v1562 = vunpack.c.l.b16 %v1220
        %v1563 = vunpack.c.h.b16 %v1220
        %v1564 = vunpack.c.l.b16 %v1221
        %v1565 = vunpack.c.h.b16 %v1221
        %v1566 = vunpack.c.l.b16 %v1222
        %v1567 = vunpack.c.h.b16 %v1222
        %v1568 = vunpack.c.l.b16 %v1223
        %v1569 = vunpack.c.h.b16 %v1223
        %v1570 = vunpack.c.l.b16 %v1224
        %v1571 = vunpack.c.h.b16 %v1224
        %v1572 = vunpack.c.l.b16 %v1225
        %v1573 = vunpack.c.h.b16 %v1225
        %v1574 = vunpack.c.l.b16 %v1226
        %v1575 = vunpack.c.h.b16 %v1226
        %v1576 = vunpack.c.l.b16 %v1227
        %v1577 = vunpack.c.h.b16 %v1227
        %v1578 = vunpack.c.l.b16 %v1228
        %v1579 = vunpack.c.h.b16 %v1228
        %v1580 = vunpack.c.l.b16 %v1229
        %v1581 = vunpack.c.h.b16 %v1229
        %v1582 = vunpack.c.l.b16 %v1230
        %v1583 = vunpack.c.h.b16 %v1230
        %v1584 = vunpack.c.l.b16 %v1231
        %v1585 = vunpack.c.h.b16 %v1231
        %v1586 = vunpack.c.l.b16 %v1232
        %v1587 = vunpack.c.h.b16 %v1232
        %v1588 = vunpack.c.l.b16 %v1233
        %v1589 = vunpack.c.h.b16 %v1233
        %v1590 = vunpack.c.l.b16 %v1234
        %v1591 = vunpack.c.h.b16 %v1234
        %v1592 = vunpack.c.l.b16 %v1235
        %v1593 = vunpack.c.h.b16 %v1235
        %v1594 = vunpack.c.l.b16 %v1236
        %v1595 = vunpack.c.h.b16 %v1236
        %v1596 = vunpack.c.l.b16 %v1237
        %v1597 = vunpack.c.h.b16 %v1237
        %v1598 = vunpack.c.l.b16 %v1238
        %v1599 = vunpack.c.h.b16 %v1238
        %v1600 = vunpack.c.l.b16 %v1239
        %v1601 = vunpack.c.h.b16 %v1239
        %v1602 = vunpack.c.l.b16 %v1240
        %v1603 = vunpack.c.h.b16 %v1240
        %v1604 = vunpack.c.l.b16 %v1241
        %v1605 = vunpack.c.h.b16 %v1241
        %v1606 = vunpack.c.l.b16 %v1242
        %v1607 = vunpack.c.h.b16 %v1242
        %v1608 = vunpack.c.l.b16 %v1243
        %v1609 = vunpack.c.h.b16 %v1243
        %v1610 = vunpack.c.l.b16 %v1244
        %v1611 = vunpack.c.h.b16 %v1244
        %v1612 = vunpack.c.l.b16 %v1245
        %v1613 = vunpack.c.h.b16 %v1245
        %v1614 = vunpack.c.l.b16 %v1246
        %v1615 = vunpack.c.h.b16 %v1246
        %v1616 = vunpack.c.l.b16 %v1247
        %v1617 = vunpack.c.h.b16 %v1247
        %v1618 = vunpack.c.l.b16 %v1248
        %v1619 = vunpack.c.h.b16 %v1248
        %v1620 = vunpack.c.l.b16 %v1249
        %v1621 = vunpack.c.h.b16 %v1249
        %v1622 = vunpack.c.l.b16 %v1250
        %v1623 = vunpack.c.h.b16 %v1250
        %v1624 = vunpack.c.l.b16 %v1251
        %v1625 = vunpack.c.h.b16 %v1251
        %v1626 = vunpack.c.l.b16 %v1252
        %v1627 = vunpack.c.h.b16 %v1252
        %v1628 = vunpack.c.l.b16 %v1253
        %v1629 = vunpack.c.h.b16 %v1253
        %v1630 = vunpack.c.l.b16 %v1254
        %v1631 = vunpack.c.h.b16 %v1254
        %v1632 = vunpack.c.l.b16 %v1255
        %v1633 = vunpack.c.h.b16 %v1255
        %v1634 = vunpack.c.l.b16 %v1256
        %v1635 = vunpack.c.h.b16 %v1256
        %v1636 = vunpack.c.l.b16 %v1257
        %v1637 = vunpack.c.h.b16 %v1257
        %v1638 = vunpack.c.l.b16 %v1258
        %v1639 = vunpack.c.h.b16 %v1258
        %v1640 = vunpack.c.l.b16 %v1259
        %v1641 = vunpack.c.h.b16 %v1259
        %v1642 = vunpack.c.l.b16 %v1260
        %v1643 = vunpack.c.h.b16 %v1260
        %v1644 = vunpack.c.l.b16 %v1261
        %v1645 = vunpack.c.h.b16 %v1261
        %v1646 = vunpack.c.l.b16 %v1262
        %v1647 = vunpack.c.h.b16 %v1262
        %v1648 = vunpack.c.l.b16 %v1263
        %v1649 = vunpack.c.h.b16 %v1263
        %v1650 = vunpack.c.l.b16 %v1264
        %v1651 = vunpack.c.h.b16 %v1264
        %v1652 = vunpack.c.l.b16 %v1265
        %v1653 = vunpack.c.h.b16 %v1265
        %v1654 = vunpack.c.l.b16 %v1266
        %v1655 = vunpack.c.h.b16 %v1266
        %v1656 = vunpack.c.l.b16 %v1267
        %v1657 = vunpack.c.h.b16 %v1267
        %v1658 = vunpack.c.l.b16 %v1268
        %v1659 = vunpack.c.h.b16 %v1268
        %v1660 = vunpack.c.l.b16 %v1269
        %v1661 = vunpack.c.h.b16 %v1269
        %v1662 = vunpack.c.l.b16 %v1270
        %v1663 = vunpack.c.h.b16 %v1270
        %v1664 = vunpack.c.l.b16 %v1271
        %v1665 = vunpack.c.h.b16 %v1271
        %v1666 = vunpack.c.l.b16 %v1272
        %v1667 = vunpack.c.h.b16 %v1272
        %v1668 = vunpack.c.l.b16 %v1273
        %v1669 = vunpack.c.h.b16 %v1273
        %v1670 = vunpack.c.l.b16 %v1274
        %v1671 = vunpack.c.h.b16 %v1274
        %v1672 = vunpack.c.l.b16 %v1275
        %v1673 = vunpack.c.h.b16 %v1275
        %v1674 = vunpack.c.l.b16 %v1276
        %v1675 = vunpack.c.h.b16 %v1276
        %v1676 = vunpack.c.l.b16 %v1277
        %v1677 = vunpack.c.h.b16 %v1277
        %v1678 = vunpack.c.l.b16 %v1278
        %v1679 = vunpack.c.h.b16 %v1278
        %v1680 = vunpack.c.l.b16 %v1279
        %v1681 = vunpack.c.h.b16 %v1279
        %v1682 = vunpack.c.l.b16 %v1280
        %v1683 = vunpack.c.h.b16 %v1280
        %v1684 = vunpack.c.l.b16 %v1281
        %v1685 = vunpack.c.h.b16 %v1281
        %v1686 = vunpack.c.l.b16 %v1282
        %v1687 = vunpack.c.h.b16 %v1282
        %v1688 = vunpack.c.l.b16 %v1283
        %v1689 = vunpack.c.h.b16 %v1283
        %v1690 = vpack.c.b16 %v1438, %v1434
        %v1691 = vpack.c.b16 %v1439, %v1435
        %v1692 = vpack.c.b16 %v1440, %v1436
        %v1693 = vpack.c.b16 %v1441, %v1437
        %v1694 = vpack.c.b16 %v1446, %v1442
        %v1695 = vpack.c.b16 %v1447, %v1443
        %v1696 = vpack.c.b16 %v1448, %v1444
        %v1697 = vpack.c.b16 %v1449, %v1445
        %v1698 = vpack.c.b16 %v1454, %v1450
        %v1699 = vpack.c.b16 %v1455, %v1451
        %v1700 = vpack.c.b16 %v1456, %v1452
        %v1701 = vpack.c.b16 %v1457, %v1453
        %v1702 = vpack.c.b16 %v1462, %v1458
        %v1703 = vpack.c.b16 %v1463, %v1459
        %v1704 = vpack.c.b16 %v1464, %v1460
        %v1705 = vpack.c.b16 %v1465, %v1461
        %v1706 = vpack.c.b16 %v1470, %v1466
        %v1707 = vpack.c.b16 %v1471, %v1467
        %v1708 = vpack.c.b16 %v1472, %v1468
        %v1709 = vpack.c.b16 %v1473, %v1469
        %v1710 = vpack.c.b16 %v1478, %v1474
        %v1711 = vpack.c.b16 %v1479, %v1475
        %v1712 = vpack.c.b16 %v1480, %v1476
        %v1713 = vpack.c.b16 %v1481, %v1477
        %v1714 = vpack.c.b16 %v1486, %v1482
        %v1715 = vpack.c.b16 %v1487, %v1483
        %v1716 = vpack.c.b16 %v1488, %v1484
        %v1717 = vpack.c.b16 %v1489, %v1485
        %v1718 = vpack.c.b16 %v1494, %v1490
        %v1719 = vpack.c.b16 %v1495, %v1491
        %v1720 = vpack.c.b16 %v1496, %v1492
        %v1721 = vpack.c.b16 %v1497, %v1493
        %v1722 = vpack.c.b16 %v1502, %v1498
        %v1723 = vpack.c.b16 %v1503, %v1499
        %v1724 = vpack.c.b16 %v1504, %v1500
        %v1725 = vpack.c.b16 %v1505, %v1501
        %v1726 = vpack.c.b16 %v1510, %v1506
        %v1727 = vpack.c.b16 %v1511, %v1507
        %v1728 = vpack.c.b16 %v1512, %v1508
        %v1729 = vpack.c.b16 %v1513, %v1509
        %v1730 = vpack.c.b16 %v1518, %v1514
        %v1731 = vpack.c.b16 %v1519, %v1515
        %v1732 = vpack.c.b16 %v1520, %v1516
        %v1733 = vpack.c.b16 %v1521, %v1517
        %v1734 = vpack.c.b16 %v1526, %v1522
        %v1735 = vpack.c.b16 %v1527, %v1523
        %v1736 = vpack.c.b16 %v1528, %v1524
        %v1737 = vpack.c.b16 %v1529, %v1525
        %v1738 = vpack.c.b16 %v1534, %v1530
        %v1739 = vpack.c.b16 %v1535, %v1531
        %v1740 = vpack.c.b16 %v1536, %v1532
        %v1741 = vpack.c.b16 %v1537, %v1533
        %v1742 = vpack.c.b16 %v1542, %v1538
        %v1743 = vpack.c.b16 %v1543, %v1539
        %v1744 = vpack.c.b16 %v1544, %v1540
        %v1745 = vpack.c.b16 %v1545, %v1541
        %v1746 = vpack.c.b16 %v1550, %v1546
        %v1747 = vpack.c.b16 %v1551, %v1547
        %v1748 = vpack.c.b16 %v1552, %v1548
        %v1749 = vpack.c.b16 %v1553, %v1549
        %v1750 = vpack.c.b16 %v1558, %v1554
        %v1751 = vpack.c.b16 %v1559, %v1555
        %v1752 = vpack.c.b16 %v1560, %v1556
        %v1753 = vpack.c.b16 %v1561, %v1557
        %v1754 = vpack.c.b16 %v1566, %v1562
        %v1755 = vpack.c.b16 %v1567, %v1563
        %v1756 = vpack.c.b16 %v1568, %v1564
        %v1757 = vpack.c.b16 %v1569, %v1565
        %v1758 = vpack.c.b16 %v1574, %v1570
        %v1759 = vpack.c.b16 %v1575, %v1571
        %v1760 = vpack.c.b16 %v1576, %v1572
        %v1761 = vpack.c.b16 %v1577, %v1573
        %v1762 = vpack.c.b16 %v1582, %v1578
        %v1763 = vpack.c.b16 %v1583, %v1579
        %v1764 = vpack.c.b16 %v1584, %v1580
        %v1765 = vpack.c.b16 %v1585, %v1581
        %v1766 = vpack.c.b16 %v1590, %v1586
        %v1767 = vpack.c.b16 %v1591, %v1587
        %v1768 = vpack.c.b16 %v1592, %v1588
        %v1769 = vpack.c.b16 %v1593, %v1589
        %v1770 = vpack.c.b16 %v1598, %v1594
        %v1771 = vpack.c.b16 %v1599, %v1595
        %v1772 = vpack.c.b16 %v1600, %v1596
        %v1773 = vpack.c.b16 %v1601, %v1597
        %v1774 = vpack.c.b16 %v1606, %v1602
        %v1775 = vpack.c.b16 %v1607, %v1603
        %v1776 = vpack.c.b16 %v1608, %v1604
        %v1777 = vpack.c.b16 %v1609, %v1605
        %v1778 = vpack.c.b16 %v1614, %v1610
        %v1779 = vpack.c.b16 %v1615, %v1611
        %v1780 = vpack.c.b16 %v1616, %v1612
        %v1781 = vpack.c.b16 %v1617, %v1613
        %v1782 = vpack.c.b16 %v1622, %v1618
        %v1783 = vpack.c.b16 %v1623, %v1619
        %v1784 = vpack.c.b16 %v1624, %v1620
        %v1785 = vpack.c.b16 %v1625, %v1621
        %v1786 = vpack.c.b16 %v1630, %v1626
        %v1787 = vpack.c.b16 %v1631, %v1627
        %v1788 = vpack.c.b16 %v1632, %v1628
        %v1789 = vpack.c.b16 %v1633, %v1629
        %v1790 = vpack.c.b16 %v1638, %v1634
        %v1791 = vpack.c.b16 %v1639, %v1635
        %v1792 = vpack.c.b16 %v1640, %v1636
        %v1793 = vpack.c.b16 %v1641, %v1637
        %v1794 = vpack.c.b16 %v1646, %v1642
        %v1795 = vpack.c.b16 %v1647, %v1643
        %v1796 = vpack.c.b16 %v1648, %v1644
        %v1797 = vpack.c.b16 %v1649, %v1645
        %v1798 = vpack.c.b16 %v1654, %v1650
        %v1799 = vpack.c.b16 %v1655, %v1651
        %v1800 = vpack.c.b16 %v1656, %v1652
        %v1801 = vpack.c.b16 %v1657, %v1653
        %v1802 = vpack.c.b16 %v1662, %v1658
        %v1803 = vpack.c.b16 %v1663, %v1659
        %v1804 = vpack.c.b16 %v1664, %v1660
        %v1805 = vpack.c.b16 %v1665, %v1661
        %v1806 = vpack.c.b16 %v1670, %v1666
        %v1807 = vpack.c.b16 %v1671, %v1667
        %v1808 = vpack.c.b16 %v1672, %v1668
        %v1809 = vpack.c.b16 %v1673, %v1669
        %v1810 = vpack.c.b16 %v1678, %v1674
        %v1811 = vpack.c.b16 %v1679, %v1675
        %v1812 = vpack.c.b16 %v1680, %v1676
        %v1813 = vpack.c.b16 %v1681, %v1677
        %v1814 = vpack.c.b16 %v1686, %v1682
        %v1815 = vpack.c.b16 %v1687, %v1683
        %v1816 = vpack.c.b16 %v1688, %v1684
        %v1817 = vpack.c.b16 %v1689, %v1685
        %1946 = vmatprep.subr.bf16.mxu0 %v1691
        %1947 = vmatpush1.bf16.msra.mxu0 %v1690
        %1948 = vmatprep.subr.bf16.mxu0 %v1695
        %1949 = vmatpush1.bf16.msra.mxu0 %v1694
        %1950 = vmatprep.subr.bf16.mxu0 %v1699
        %1951 = vmatpush1.bf16.msra.mxu0 %v1698
        %1952 = vmatprep.subr.bf16.mxu0 %v1703
        %1953 = vmatpush1.bf16.msra.mxu0 %v1702
        %1954 = vmatprep.subr.bf16.mxu0 %v1707
        %1955 = vmatpush1.bf16.msra.mxu0 %v1706
        %1956 = vmatprep.subr.bf16.mxu0 %v1711
        %1957 = vmatpush1.bf16.msra.mxu0 %v1710
        %1958 = vmatprep.subr.bf16.mxu0 %v1715
        %1959 = vmatpush1.bf16.msra.mxu0 %v1714
        %1960 = vmatprep.subr.bf16.mxu0 %v1719
        %1961 = vmatpush1.bf16.msra.mxu0 %v1718
        %1962 = vmatprep.subr.bf16.mxu0 %v1723
        %1963 = vmatpush1.bf16.msra.mxu0 %v1722
        %1964 = vmatprep.subr.bf16.mxu0 %v1727
        %1965 = vmatpush1.bf16.msra.mxu0 %v1726
        %1966 = vmatprep.subr.bf16.mxu0 %v1731
        %1967 = vmatpush1.bf16.msra.mxu0 %v1730
        %1968 = vmatprep.subr.bf16.mxu0 %v1735
        %1969 = vmatpush1.bf16.msra.mxu0 %v1734
        %1970 = vmatprep.subr.bf16.mxu0 %v1739
        %1971 = vmatpush1.bf16.msra.mxu0 %v1738
        %1972 = vmatprep.subr.bf16.mxu0 %v1743
        %1973 = vmatpush1.bf16.msra.mxu0 %v1742
        %1974 = vmatprep.subr.bf16.mxu0 %v1747
        %1975 = vmatpush1.bf16.msra.mxu0 %v1746
        %1976 = vmatprep.subr.bf16.mxu0 %v1751
        %1977 = vmatpush1.bf16.msra.mxu0 %v1750
        %1978 = vmatprep.mubr.bf16.mxu0 %v1153
        %1979 = vmatmul.mubr.bf16.gmra.mrb[0].mxu0 %v1152
        %v1980 = vpop.f32.mrb[0].mxu0
        %v1981 = vadd.f32 %v1289, %v1980
        %v1982 = vpop.f32.mrb[0].mxu0
        %v1983 = vadd.f32 %v1293, %v1982
        %v1984 = vpop.f32.mrb[0].mxu0
        %v1985 = vpop.f32.mrb[0].mxu0
        %1986 = vdwg.mxu0
        %1987 = vmatprep.subr.bf16.mxu0 %v1755
        %1988 = vmatpush1.bf16.msra.mxu0 %v1754
        %1989 = vmatprep.subr.bf16.mxu0 %v1759
        %1990 = vmatpush1.bf16.msra.mxu0 %v1758
        %1991 = vmatprep.subr.bf16.mxu0 %v1763
        %1992 = vmatpush1.bf16.msra.mxu0 %v1762
        %1993 = vmatprep.subr.bf16.mxu0 %v1767
        %1994 = vmatpush1.bf16.msra.mxu0 %v1766
        %1995 = vmatprep.subr.bf16.mxu0 %v1771
        %1996 = vmatpush1.bf16.msra.mxu0 %v1770
        %1997 = vmatprep.subr.bf16.mxu0 %v1775
        %1998 = vmatpush1.bf16.msra.mxu0 %v1774
        %1999 = vmatprep.subr.bf16.mxu0 %v1779
        %2000 = vmatpush1.bf16.msra.mxu0 %v1778
        %2001 = vmatprep.subr.bf16.mxu0 %v1783
        %2002 = vmatpush1.bf16.msra.mxu0 %v1782
        %2003 = vmatprep.subr.bf16.mxu0 %v1787
        %2004 = vmatpush1.bf16.msra.mxu0 %v1786
        %2005 = vmatprep.subr.bf16.mxu0 %v1791
        %2006 = vmatpush1.bf16.msra.mxu0 %v1790
        %2007 = vmatprep.subr.bf16.mxu0 %v1795
        %2008 = vmatpush1.bf16.msra.mxu0 %v1794
        %2009 = vmatprep.subr.bf16.mxu0 %v1799
        %2010 = vmatpush1.bf16.msra.mxu0 %v1798
        %2011 = vmatprep.subr.bf16.mxu0 %v1803
        %2012 = vmatpush1.bf16.msra.mxu0 %v1802
        %2013 = vmatprep.subr.bf16.mxu0 %v1807
        %2014 = vmatpush1.bf16.msra.mxu0 %v1806
        %2015 = vmatprep.subr.bf16.mxu0 %v1811
        %2016 = vmatpush1.bf16.msra.mxu0 %v1810
        %2017 = vmatprep.subr.bf16.mxu0 %v1815
        %2018 = vmatpush1.bf16.msra.mxu0 %v1814
        %2019 = vmatprep.mubr.bf16.mxu0 %v1155
        %2020 = vmatmul.mubr.bf16.gmra.mrb[0].mxu0 %v1154
        %v2021 = vpop.f32.mrb[0].mxu0
        %v2022 = vadd.f32 %v1981, %v2021
        %v2023 = vpop.f32.mrb[0].mxu0
        %v2024 = vadd.f32 %v1983, %v2023
        %v2025 = vpop.f32.mrb[0].mxu0
        %v2026 = vpop.f32.mrb[0].mxu0
        %2027 = vdwg.mxu0
        %2028 = vmatprep.subr.bf16.mxu0 %v1693
        %2029 = vmatpush1.bf16.msra.mxu0 %v1692
        %2030 = vmatprep.subr.bf16.mxu0 %v1697
        %2031 = vmatpush1.bf16.msra.mxu0 %v1696
        %2032 = vmatprep.subr.bf16.mxu0 %v1701
        %2033 = vmatpush1.bf16.msra.mxu0 %v1700
        %2034 = vmatprep.subr.bf16.mxu0 %v1705
        %2035 = vmatpush1.bf16.msra.mxu0 %v1704
        %2036 = vmatprep.subr.bf16.mxu0 %v1709
        %2037 = vmatpush1.bf16.msra.mxu0 %v1708
        %2038 = vmatprep.subr.bf16.mxu0 %v1713
        %2039 = vmatpush1.bf16.msra.mxu0 %v1712
        %2040 = vmatprep.subr.bf16.mxu0 %v1717
        %2041 = vmatpush1.bf16.msra.mxu0 %v1716
        %2042 = vmatprep.subr.bf16.mxu0 %v1721
        %2043 = vmatpush1.bf16.msra.mxu0 %v1720
        %2044 = vmatprep.subr.bf16.mxu0 %v1725
        %2045 = vmatpush1.bf16.msra.mxu0 %v1724
        %2046 = vmatprep.subr.bf16.mxu0 %v1729
        %2047 = vmatpush1.bf16.msra.mxu0 %v1728
        %2048 = vmatprep.subr.bf16.mxu0 %v1733
        %2049 = vmatpush1.bf16.msra.mxu0 %v1732
        %2050 = vmatprep.subr.bf16.mxu0 %v1737
        %2051 = vmatpush1.bf16.msra.mxu0 %v1736
        %2052 = vmatprep.subr.bf16.mxu0 %v1741
        %2053 = vmatpush1.bf16.msra.mxu0 %v1740
        %2054 = vmatprep.subr.bf16.mxu0 %v1745
        %2055 = vmatpush1.bf16.msra.mxu0 %v1744
        %2056 = vmatprep.subr.bf16.mxu0 %v1749
        %2057 = vmatpush1.bf16.msra.mxu0 %v1748
        %2058 = vmatprep.subr.bf16.mxu0 %v1753
        %2059 = vmatpush1.bf16.msra.mxu0 %v1752
        %2060 = vmatprep.mubr.bf16.mxu0 %v1153
        %2061 = vmatmul.mubr.bf16.gmra.mrb[0].mxu0 %v1152
        %v2062 = vpop.f32.mrb[0].mxu0
        %v2063 = vadd.f32 %v1297, %v2062
        %v2064 = vpop.f32.mrb[0].mxu0
        %v2065 = vadd.f32 %v1301, %v2064
        %v2066 = vpop.f32.mrb[0].mxu0
        %v2067 = vpop.f32.mrb[0].mxu0
        %2068 = vdwg.mxu0
        %2069 = vmatprep.subr.bf16.mxu0 %v1757
        %2070 = vmatpush1.bf16.msra.mxu0 %v1756
        %2071 = vmatprep.subr.bf16.mxu0 %v1761
        %2072 = vmatpush1.bf16.msra.mxu0 %v1760
        %2073 = vmatprep.subr.bf16.mxu0 %v1765
        %2074 = vmatpush1.bf16.msra.mxu0 %v1764
        %2075 = vmatprep.subr.bf16.mxu0 %v1769
        %2076 = vmatpush1.bf16.msra.mxu0 %v1768
        %2077 = vmatprep.subr.bf16.mxu0 %v1773
        %2078 = vmatpush1.bf16.msra.mxu0 %v1772
        %2079 = vmatprep.subr.bf16.mxu0 %v1777
        %2080 = vmatpush1.bf16.msra.mxu0 %v1776
        %2081 = vmatprep.subr.bf16.mxu0 %v1781
        %2082 = vmatpush1.bf16.msra.mxu0 %v1780
        %2083 = vmatprep.subr.bf16.mxu0 %v1785
        %2084 = vmatpush1.bf16.msra.mxu0 %v1784
        %2085 = vmatprep.subr.bf16.mxu0 %v1789
        %2086 = vmatpush1.bf16.msra.mxu0 %v1788
        %2087 = vmatprep.subr.bf16.mxu0 %v1793
        %2088 = vmatpush1.bf16.msra.mxu0 %v1792
        %2089 = vmatprep.subr.bf16.mxu0 %v1797
        %2090 = vmatpush1.bf16.msra.mxu0 %v1796
        %2091 = vmatprep.subr.bf16.mxu0 %v1801
        %2092 = vmatpush1.bf16.msra.mxu0 %v1800
        %2093 = vmatprep.subr.bf16.mxu0 %v1805
        %2094 = vmatpush1.bf16.msra.mxu0 %v1804
        %2095 = vmatprep.subr.bf16.mxu0 %v1809
        %2096 = vmatpush1.bf16.msra.mxu0 %v1808
        %2097 = vmatprep.subr.bf16.mxu0 %v1813
        %2098 = vmatpush1.bf16.msra.mxu0 %v1812
        %2099 = vmatprep.subr.bf16.mxu0 %v1817
        %2100 = vmatpush1.bf16.msra.mxu0 %v1816
        %2101 = vmatprep.mubr.bf16.mxu0 %v1155
        %2102 = vmatmul.mubr.bf16.gmra.mrb[0].mxu0 %v1154
        %v2103 = vpop.f32.mrb[0].mxu0
        %v2104 = vadd.f32 %v2063, %v2103
        %v2105 = vpop.f32.mrb[0].mxu0
        %v2106 = vadd.f32 %v2065, %v2105
        %v2107 = vpop.f32.mrb[0].mxu0
        %v2108 = vpop.f32.mrb[0].mxu0
        %2109 = vdwg.mxu0
        %v2110 = vmax.f32 %v2022, 0.0
        %v2111 = vmax.f32 %v2024, 0.0
        %v2112 = vmax.f32 %v2104, 0.0
        %v2113 = vmax.f32 %v2106, 0.0
        %v2114 = vadd.f32 %v845, %v2110
        %v2115 = vadd.f32 %v947, %v2111
        %v2116 = vadd.f32 %v1049, %v2112
        %v2117 = vadd.f32 %v1151, %v2113
        %2118 = vst [vmem:[%s281] sm:$0xff] %v2114
        %2119 = vst [vmem:[%s281 + $0x8] sm:$0xff] %v2115
        %2120 = vst [vmem:[%s281 + $0x10] sm:$0xff] %v2116
        %2121 = vst [vmem:[%s281 + $0x18] sm:$0xff] %v2117
        %s2122 = sand.u32 %s142, 1
        %s2123 = scalar_lea.sflag [#allocation4], %s2122
        %s2124 = sand.u32 %s142, 1
        %s2125 = smul.addr %s2124, 32
        %s2126 = scalar_lea.vmem [#allocation10], %s2125
        // Predicated region
        $region57: #{tpu_custom_call.1} parent=39 // pred_check
          %p2127 = pneg %p152
        $region58: #{tpu_custom_call.1} parent=39 // pred_check_branch
          %2129 = sbr.rel (%p2127) target = $region60
        $region59: #{tpu_custom_call.1} parent=39 // pred_region
          %s2131 = ssub.s32 512, 512
          %2132 = vsyncadd %s2123, %s2131
          %s2133 = smul.addr %s24, 4
          %s2134 = smul.addr %s2133, 128
          %s2135 = scalar_lea.hbm %s5, %s2134
          %s2137 = sshll.u32 %s2126, 4
          %s2138 = int_to_ptr.vmem [resolvable:$true] %s2137
          %2140 = dma.vmem_to_hbm [thread:$0]  %s2138, 512, %s2135, %s2123
        $region60: #{tpu_custom_call.1} parent=39 // pred_fallthru
          _
      $region40: #{tpu_custom_call.1} parent=5 // pred_fallthru
        _
      %p2141 = scmp.le.s32.totalorder 2, %s19
      // Predicated region
      $region61: #{tpu_custom_call.1} parent=5 // pred_check
        %p2142 = pneg %p2141
      $region62: #{tpu_custom_call.1} parent=5 // pred_check_branch
        %2144 = sbr.rel (%p2142) target = $region64
      $region63: #{tpu_custom_call.1} parent=5 // pred_region
        %s2145 = ssub.s32 %s19, 2
        // Predicated region
        $region65: #{tpu_custom_call.1} parent=63 // pred_check
          %p2146 = pneg %p158
        $region66: #{tpu_custom_call.1} parent=63 // pred_check_branch
          %2148 = sbr.rel (%p2146) target = $region68
        $region67: #{tpu_custom_call.1} parent=63 // pred_region
          %s2149 = sand.u32 %s143, 1
          %s2150 = scalar_lea.sflag [#allocation4], %s2149
          %s2151 = sand.u32 %s143, 1
          %s2152 = smul.addr %s2151, 32
          %s2153 = scalar_lea.vmem [#allocation10], %s2152
          %2154 = dma.done %s2150, 512
        $region68: #{tpu_custom_call.1} parent=63 // pred_fallthru
          _
      $region64: #{tpu_custom_call.1} parent=5 // pred_fallthru
        _
    $region6: #{tpu_custom_call.1} parent=1 // loop_footer
      %s23 = sadd.s32 1, %s19
    $region7: #{tpu_custom_call.1} parent=1 // loop_footer_branch
      %18 = sbr.rel target = $region3
    $region8: #{tpu_custom_call.1} parent=1 // loop_exit
      _
    %2155 = vsyncpa [#allocation3], 1
    %s2156 = scalar_lea.sflag [#allocation3], 1
    %2157 = vsyncpa %s2156, 1
    %2158 = vsyncpa [#allocation6], 1
    %2159 = vsyncpa [#allocation9], 1
    %2160 = vsyncpa [#allocation4], 1
    %s2161 = scalar_lea.sflag [#allocation4], 1
    %2162 = vsyncpa %s2161, 1

</llo_original>
